<compile_context>
chip_gen: v7x
topology: tpu7x:2x2x1
jax: 0.10.0
libtpu: 0.0.40
codegen_flags: <defaults>
</compile_context>

<pallas_src>
import jax
import jax.numpy as jnp
from jax.experimental import pallas as pl
from jax.experimental.pallas import tpu as pltpu


LANE = 128      # vreg lane width
SUBLANE = 8     # vreg sublane count
TM_MAX = 256    # row tile for the projection kernel; 2 inputs x 2 buffers x
                # (TM x Dx) + weights stays well under v7x's 64 MiB VMEM/TC.


def _round_up(x, m):
    return (x + m - 1) // m * m


def _pad_axis(a, target, axis):
    pad = target - a.shape[axis]
    if pad == 0:
        return a
    widths = [(0, 0)] * a.ndim
    widths[axis] = (0, pad)
    return jnp.pad(a, widths)


# ---------------------------------------------------------------------------
# Kernel 1: fused MLP head + RNN input projection, tiled over residues (rows).
# ---------------------------------------------------------------------------
def _proj_kernel(e_ref, m_ref, w1e_ref, w1m_ref, b1_ref, w2_ref, b2_ref,
                 wxe_ref, wxm_ref, bx_ref, mlp_ref, xp_ref):
    e = e_ref[...]                                        # (TM, D1)
    m = m_ref[...]                                        # (TM, D2)

    # MLP hidden layer; concat(embed, msa) @ W1 == e @ W1a + m @ W1b
    h1 = (jnp.dot(e, w1e_ref[...], preferred_element_type=jnp.float32)
          + jnp.dot(m, w1m_ref[...], preferred_element_type=jnp.float32)
          + b1_ref[...])
    h1 = jnp.maximum(h1, 0.0)                             # ReLU, (TM, Hp)

    # (TM,Hp) x (Hp,1) readout as a lane reduction; store lane-dense (1, TM).
    z = jnp.sum(h1 * w2_ref[...], axis=-1)[None, :] + b2_ref[...]
    mlp_ref[...] = jax.nn.sigmoid(z)                      # (1, TM)

    # RNN input projection hoisted out of the recurrence: x @ Wx + b
    xp_ref[...] = (jnp.dot(e, wxe_ref[...], preferred_element_type=jnp.float32)
                   + jnp.dot(m, wxm_ref[...], preferred_element_type=jnp.float32)
                   + bx_ref[...])                         # (TM, Hp)


def _projection(e_flat, m_flat, w1e, w1m, b1, w2row, b2, wxe, wxm, bx, *, tm):
    n_pad, d1 = e_flat.shape
    d2 = m_flat.shape[1]
    hp = w1e.shape[1]
    g = n_pad // tm
    wmap = lambda i: (0, 0)                               # weights stay resident
    return pl.pallas_call(
        _proj_kernel,
        out_shape=(
            jax.ShapeDtypeStruct((g, 1, tm), jnp.float32),    # MLP head, lane-dense
            jax.ShapeDtypeStruct((n_pad, hp), jnp.float32),   # x @ Wx + b
        ),
        grid=(g,),
        in_specs=[
            pl.BlockSpec((tm, d1), lambda i: (i, 0)),
            pl.BlockSpec((tm, d2), lambda i: (i, 0)),
            pl.BlockSpec((d1, hp), wmap),
            pl.BlockSpec((d2, hp), wmap),
            pl.BlockSpec((1, hp), wmap),
            pl.BlockSpec((1, hp), wmap),
            pl.BlockSpec((1, 1), wmap),
            pl.BlockSpec((d1, hp), wmap),
            pl.BlockSpec((d2, hp), wmap),
            pl.BlockSpec((1, hp), wmap),
        ],
        out_specs=[
            pl.BlockSpec((None, 1, tm), lambda i: (i, 0, 0)),
            pl.BlockSpec((tm, hp), lambda i: (i, 0)),
        ],
        compiler_params=pltpu.CompilerParams(
            dimension_semantics=("parallel",),             # megacore on v7x
            vmem_limit_bytes=48 * 1024 * 1024,
        ),
    )(e_flat, m_flat, w1e, w1m, b1, w2row, b2, wxe, wxm, bx)


# ---------------------------------------------------------------------------
# Kernel 2: recurrence over time (in-kernel loop) + readout + ensemble average.
# ---------------------------------------------------------------------------
def _rnn_avg_kernel(xp_ref, mlp_ref, wh_ref, wo_ref, bo_ref, o_ref, h_scr, y_scr):
    wh = wh_ref[...]                                      # (Hp, Hp) resident
    wo = wo_ref[...]                                      # (1, Hp)
    bo = bo_ref[...]                                      # (1, 1)
    h_scr[...] = jnp.zeros_like(h_scr)                    # h_0 = 0

    seq_len = xp_ref.shape[0]

    @pl.loop(0, seq_len, unroll=True)
    def _(t):
        pre = xp_ref[t] + jnp.dot(h_scr[...], wh,
                                  preferred_element_type=jnp.float32)
        h_new = jnp.tanh(pre)                             # (B, Hp)
        h_scr[...] = h_new
        # readout as a lane reduction (no 1-wide MXU pass)
        y = jax.nn.sigmoid(jnp.sum(h_new * wo, axis=-1)[None, :] + bo)  # (1, B)
        y_scr[t] = y

    # fused ensemble average; single store of the whole chunk
    o_ref[...] = (y_scr[...] + mlp_ref[...]) * 0.5


def _rnn_and_average(xp_lbh, mlp_l1b, wh, wo_row, bo):
    seq_len, batch, hp = xp_lbh.shape
    return pl.pallas_call(
        _rnn_avg_kernel,
        out_shape=jax.ShapeDtypeStruct((seq_len, 1, batch), jnp.float32),
        scratch_shapes=[
            pltpu.VMEM((batch, hp), jnp.float32),          # hidden state
            pltpu.VMEM((seq_len, 1, batch), jnp.float32),  # per-step readouts
        ],
    )(xp_lbh, mlp_l1b, wh, wo_row, bo)


# ---------------------------------------------------------------------------
# SeqInSite forward
# ---------------------------------------------------------------------------
def seq_in_site_forward(embed, msa_embed, params):
    B, L, D1 = embed.shape
    D2 = msa_embed.shape[-1]
    H = params["w1"].shape[1]
    Hp = max(LANE, _round_up(H, LANE))                    # lane-pad hidden width

    # ---- split W1 / Wx row-wise (fuses the concat away) and zero-pad H ----
    w1, wx = params["w1"], params["wx"]
    w1e = _pad_axis(w1[:D1], Hp, 1)
    w1m = _pad_axis(w1[D1:], Hp, 1)
    b1 = _pad_axis(params["b1"], Hp, 1)
    w2row = _pad_axis(params["w2"].T, Hp, 1)              # (1, Hp)
    b2 = params["b2"]                                     # (1, 1)
    wxe = _pad_axis(wx[:D1], Hp, 1)
    wxm = _pad_axis(wx[D1:], Hp, 1)
    bx = _pad_axis(params["b"], Hp, 1)
    wh = _pad_axis(_pad_axis(params["wh"], Hp, 0), Hp, 1)  # (Hp, Hp)
    wo_row = _pad_axis(params["wo"].T, Hp, 1)             # (1, Hp)
    bo = params["bo"]                                     # (1, 1)

    # ---- flatten residues batch-major; pad rows to the tile ----
    N = B * L
    e_flat = embed.reshape(N, D1)
    m_flat = msa_embed.reshape(N, D2)
    TM = min(TM_MAX, _round_up(N, SUBLANE))
    N_pad = _round_up(N, TM)
    e_flat = _pad_axis(e_flat, N_pad, 0)
    m_flat = _pad_axis(m_flat, N_pad, 0)

    mlp_tiles, xp = _projection(e_flat, m_flat, w1e, w1m, b1, w2row, b2,
                                wxe, wxm, bx, tm=TM)

    # MLP head back to (L, 1, B) (matches the RNN kernel's output layout)
    mlp_flat = mlp_tiles.reshape(N_pad)[:N]
    mlp_l1b = jnp.transpose(mlp_flat.reshape(B, L), (1, 0))[:, None, :]

    # RNN pre-activations, time-major for leading-axis indexing in the kernel
    xp_lbh = jnp.transpose(xp[:N].reshape(B, L, Hp), (1, 0, 2))   # (L, B, Hp)

    out_l1b = _rnn_and_average(xp_lbh, mlp_l1b, wh, wo_row, bo)   # (L, 1, B)
    out = jnp.transpose(out_l1b.reshape(L, B), (1, 0))[..., None]  # (B, L, 1)
    return out


# pure-JAX reference for verification
def seq_in_site_reference(embed, msa_embed, p):
    x = jnp.concatenate([embed, msa_embed], axis=-1)
    B, L, Dx = x.shape
    xf = x.reshape(B * L, Dx)
    mlp = jax.nn.sigmoid(jnp.maximum(xf @ p["w1"] + p["b1"], 0.0) @ p["w2"] + p["b2"])
    mlp = mlp.reshape(B, L, 1)

    def step(h, x_t):
        h_new = jnp.tanh(x_t @ p["wx"] + h @ p["wh"] + p["b"])
        y = jax.nn.sigmoid(h_new @ p["wo"] + p["bo"])
        return h_new, y

    h0 = jnp.zeros((B, p["wh"].shape[0]), jnp.float32)
    _, ys = jax.lax.scan(step, h0, jnp.transpose(x, (1, 0, 2)))
    rnn = jnp.transpose(ys, (1, 0, 2))
    return (mlp + rnn) / 2


if __name__ == "__main__":
    # small synthetic shapes
    B, L, D1, D2, H = 2, 8, 32, 16, 32
    Dx = D1 + D2

    key = jax.random.PRNGKey(0)
    ks = jax.random.split(key, 10)
    embed = jax.random.normal(ks[0], (B, L, D1), jnp.float32)
    msa_embed = jax.random.normal(ks[1], (B, L, D2), jnp.float32)

    params = {
        "w1": 0.1 * jax.random.normal(ks[2], (Dx, H), jnp.float32),
        "b1": 0.1 * jax.random.normal(ks[3], (1, H), jnp.float32),
        "w2": 0.1 * jax.random.normal(ks[4], (H, 1), jnp.float32),
        "b2": 0.1 * jax.random.normal(ks[5], (1, 1), jnp.float32),
        "wx": 0.1 * jax.random.normal(ks[6], (Dx, H), jnp.float32),
        "wh": 0.1 * jax.random.normal(ks[7], (H, H), jnp.float32),
        "b":  0.1 * jax.random.normal(ks[8], (1, H), jnp.float32),
        "wo": 0.1 * jax.random.normal(ks[9], (H, 1), jnp.float32),
        "bo": jnp.zeros((1, 1), jnp.float32),
    }

    fwd = jax.jit(seq_in_site_forward)
    out = jax.block_until_ready(fwd(embed, msa_embed, params))

    ref = seq_in_site_reference(embed, msa_embed, params)
    assert out.shape == (B, L, 1)
    assert jnp.allclose(out, ref, atol=1e-5, rtol=1e-5), \
        float(jnp.max(jnp.abs(out - ref)))

    print("KERNEL_OK")
</pallas_src>

<mosaic_0001>
module attributes {stable_mosaic.version = 11 : i64} {
  func.func @_proj_kernel(%arg0: i32, %arg1: memref<16x32xf32, #tpu.memory_space<vmem>>, %arg2: memref<16x16xf32, #tpu.memory_space<vmem>>, %arg3: memref<32x128xf32, #tpu.memory_space<vmem>>, %arg4: memref<16x128xf32, #tpu.memory_space<vmem>>, %arg5: memref<1x128xf32, #tpu.memory_space<vmem>>, %arg6: memref<1x128xf32, #tpu.memory_space<vmem>>, %arg7: memref<1x1xf32, #tpu.memory_space<vmem>>, %arg8: memref<32x128xf32, #tpu.memory_space<vmem>>, %arg9: memref<16x128xf32, #tpu.memory_space<vmem>>, %arg10: memref<1x128xf32, #tpu.memory_space<vmem>>, %arg11: memref<1x1x16xf32, #tpu.memory_space<vmem>>, %arg12: memref<16x128xf32, #tpu.memory_space<vmem>>) attributes {dimension_semantics = [#tpu.dimension_semantics<parallel>], iteration_bounds = array<i64: 1>, scalar_prefetch = 0 : i64, scratch_operands = 0 : i64, tpu.core_type = #tpu.core_type<tc>, window_params = [{transform_indices = @transform_0, window_bounds = array<i64: 16, 32>}, {transform_indices = @transform_1, window_bounds = array<i64: 16, 16>}, {pipeline_mode = #tpu.pipeline_mode<synchronous>, transform_indices = @transform_2, window_bounds = array<i64: 32, 128>}, {pipeline_mode = #tpu.pipeline_mode<synchronous>, transform_indices = @transform_3, window_bounds = array<i64: 16, 128>}, {pipeline_mode = #tpu.pipeline_mode<synchronous>, transform_indices = @transform_4, window_bounds = array<i64: 1, 128>}, {pipeline_mode = #tpu.pipeline_mode<synchronous>, transform_indices = @transform_5, window_bounds = array<i64: 1, 128>}, {pipeline_mode = #tpu.pipeline_mode<synchronous>, transform_indices = @transform_6, window_bounds = array<i64: 1, 1>}, {pipeline_mode = #tpu.pipeline_mode<synchronous>, transform_indices = @transform_7, window_bounds = array<i64: 32, 128>}, {pipeline_mode = #tpu.pipeline_mode<synchronous>, transform_indices = @transform_8, window_bounds = array<i64: 16, 128>}, {pipeline_mode = #tpu.pipeline_mode<synchronous>, transform_indices = @transform_9, window_bounds = array<i64: 1, 128>}, {transform_indices = @transform_10, window_bounds = array<i64: 1, 1, 16>}, {transform_indices = @transform_11, window_bounds = array<i64: 16, 128>}]} {
    %c0 = arith.constant 0 : index
    %c0_0 = arith.constant 0 : index
    %0 = vector.load %arg1[%c0, %c0_0] : memref<16x32xf32, #tpu.memory_space<vmem>>, vector<16x32xf32>
    %c0_1 = arith.constant 0 : index
    %c0_2 = arith.constant 0 : index
    %1 = vector.load %arg2[%c0_1, %c0_2] : memref<16x16xf32, #tpu.memory_space<vmem>>, vector<16x16xf32>
    %c0_3 = arith.constant 0 : index
    %c0_4 = arith.constant 0 : index
    %2 = vector.load %arg3[%c0_3, %c0_4] : memref<32x128xf32, #tpu.memory_space<vmem>>, vector<32x128xf32>
    %cst = arith.constant dense<0.000000e+00> : vector<16x128xf32>
    %3 = tpu.matmul %0, %2, %cst {dimension_numbers = #tpu.dot_dimension_numbers<[1], [0], [0], [1], [0, 0, 1, 1], [], []>} : vector<16x32xf32>, vector<32x128xf32>, vector<16x128xf32> -> vector<16x128xf32>
    %c0_5 = arith.constant 0 : index
    %c0_6 = arith.constant 0 : index
    %4 = vector.load %arg4[%c0_5, %c0_6] : memref<16x128xf32, #tpu.memory_space<vmem>>, vector<16x128xf32>
    %cst_7 = arith.constant dense<0.000000e+00> : vector<16x128xf32>
    %5 = tpu.matmul %1, %4, %cst_7 {dimension_numbers = #tpu.dot_dimension_numbers<[1], [0], [0], [1], [0, 0, 1, 1], [], []>} : vector<16x16xf32>, vector<16x128xf32>, vector<16x128xf32> -> vector<16x128xf32>
    %6 = arith.addf %3, %5 : vector<16x128xf32>
    %c0_8 = arith.constant 0 : index
    %c0_9 = arith.constant 0 : index
    %7 = vector.load %arg5[%c0_8, %c0_9] : memref<1x128xf32, #tpu.memory_space<vmem>>, vector<1x128xf32>
    %8 = vector.broadcast %7 : vector<1x128xf32> to vector<16x128xf32>
    %9 = arith.addf %6, %8 : vector<16x128xf32>
    %cst_10 = arith.constant 0.000000e+00 : f32
    %10 = vector.broadcast %cst_10 : f32 to vector<16x128xf32>
    %11 = arith.maximumf %9, %10 : vector<16x128xf32>
    %c0_11 = arith.constant 0 : index
    %c0_12 = arith.constant 0 : index
    %12 = vector.load %arg6[%c0_11, %c0_12] : memref<1x128xf32, #tpu.memory_space<vmem>>, vector<1x128xf32>
    %13 = vector.broadcast %12 : vector<1x128xf32> to vector<16x128xf32>
    %14 = arith.mulf %11, %13 : vector<16x128xf32>
    %cst_13 = arith.constant dense<0.000000e+00> : vector<16xf32>
    %15 = vector.multi_reduction <add>, %14, %cst_13 [1] : vector<16x128xf32> to vector<16xf32>
    %16 = vector.shape_cast %15 : vector<16xf32> to vector<1x16xf32>
    %c0_14 = arith.constant 0 : index
    %c0_15 = arith.constant 0 : index
    %17 = vector.load %arg7[%c0_14, %c0_15] : memref<1x1xf32, #tpu.memory_space<vmem>>, vector<1x1xf32>
    %18 = vector.broadcast %17 : vector<1x1xf32> to vector<1x16xf32>
    %19 = arith.addf %16, %18 : vector<1x16xf32>
    %20 = arith.negf %19 : vector<1x16xf32>
    %21 = math.exp %20 : vector<1x16xf32>
    %cst_16 = arith.constant 1.000000e+00 : f32
    %22 = vector.broadcast %cst_16 : f32 to vector<1x16xf32>
    %23 = arith.addf %22, %21 : vector<1x16xf32>
    %24 = arith.divf %22, %23 : vector<1x16xf32>
    %c0_17 = arith.constant 0 : index
    %c0_18 = arith.constant 0 : index
    %c0_19 = arith.constant 0 : index
    %25 = vector.load %arg11[%c0_17, %c0_18, %c0_19] : memref<1x1x16xf32, #tpu.memory_space<vmem>>, vector<1x1x16xf32>
    %26 = vector.shape_cast %25 : vector<1x1x16xf32> to vector<1x16xf32>
    %27 = vector.shape_cast %24 : vector<1x16xf32> to vector<1x1x16xf32>
    tpu.vector_store %arg11[%c0_17, %c0_18, %c0_19], %27 {strides = array<i32>} : memref<1x1x16xf32, #tpu.memory_space<vmem>>, vector<1x1x16xf32>,
    %c0_20 = arith.constant 0 : index
    %c0_21 = arith.constant 0 : index
    %28 = vector.load %arg8[%c0_20, %c0_21] : memref<32x128xf32, #tpu.memory_space<vmem>>, vector<32x128xf32>
    %cst_22 = arith.constant dense<0.000000e+00> : vector<16x128xf32>
    %29 = tpu.matmul %0, %28, %cst_22 {dimension_numbers = #tpu.dot_dimension_numbers<[1], [0], [0], [1], [0, 0, 1, 1], [], []>} : vector<16x32xf32>, vector<32x128xf32>, vector<16x128xf32> -> vector<16x128xf32>
    %c0_23 = arith.constant 0 : index
    %c0_24 = arith.constant 0 : index
    %30 = vector.load %arg9[%c0_23, %c0_24] : memref<16x128xf32, #tpu.memory_space<vmem>>, vector<16x128xf32>
    %cst_25 = arith.constant dense<0.000000e+00> : vector<16x128xf32>
    %31 = tpu.matmul %1, %30, %cst_25 {dimension_numbers = #tpu.dot_dimension_numbers<[1], [0], [0], [1], [0, 0, 1, 1], [], []>} : vector<16x16xf32>, vector<16x128xf32>, vector<16x128xf32> -> vector<16x128xf32>
    %32 = arith.addf %29, %31 : vector<16x128xf32>
    %c0_26 = arith.constant 0 : index
    %c0_27 = arith.constant 0 : index
    %33 = vector.load %arg10[%c0_26, %c0_27] : memref<1x128xf32, #tpu.memory_space<vmem>>, vector<1x128xf32>
    %34 = vector.broadcast %33 : vector<1x128xf32> to vector<16x128xf32>
    %35 = arith.addf %32, %34 : vector<16x128xf32>
    %c0_28 = arith.constant 0 : index
    %c0_29 = arith.constant 0 : index
    %36 = vector.load %arg12[%c0_28, %c0_29] : memref<16x128xf32, #tpu.memory_space<vmem>>, vector<16x128xf32>
    tpu.vector_store %arg12[%c0_28, %c0_29], %35 {strides = array<i32>} : memref<16x128xf32, #tpu.memory_space<vmem>>, vector<16x128xf32>,
    return
  }
  func.func @transform_0(%arg0: i32) -> (i32, i32) {
    %c0_i32 = arith.constant 0 : i32
    %c0_i32_0 = arith.constant 0 : i32
    return %arg0, %c0_i32 : i32, i32
  }
  func.func @transform_1(%arg0: i32) -> (i32, i32) {
    %c0_i32 = arith.constant 0 : i32
    %c0_i32_0 = arith.constant 0 : i32
    return %arg0, %c0_i32 : i32, i32
  }
  func.func @transform_2(%arg0: i32) -> (i32, i32) {
    %c0_i32 = arith.constant 0 : i32
    %c0_i32_0 = arith.constant 0 : i32
    %c0_i32_1 = arith.constant 0 : i32
    return %c0_i32, %c0_i32_0 : i32, i32
  }
  func.func @transform_3(%arg0: i32) -> (i32, i32) {
    %c0_i32 = arith.constant 0 : i32
    %c0_i32_0 = arith.constant 0 : i32
    %c0_i32_1 = arith.constant 0 : i32
    return %c0_i32, %c0_i32_0 : i32, i32
  }
  func.func @transform_4(%arg0: i32) -> (i32, i32) {
    %c0_i32 = arith.constant 0 : i32
    %c0_i32_0 = arith.constant 0 : i32
    %c0_i32_1 = arith.constant 0 : i32
    return %c0_i32, %c0_i32_0 : i32, i32
  }
  func.func @transform_5(%arg0: i32) -> (i32, i32) {
    %c0_i32 = arith.constant 0 : i32
    %c0_i32_0 = arith.constant 0 : i32
    %c0_i32_1 = arith.constant 0 : i32
    return %c0_i32, %c0_i32_0 : i32, i32
  }
  func.func @transform_6(%arg0: i32) -> (i32, i32) {
    %c0_i32 = arith.constant 0 : i32
    %c0_i32_0 = arith.constant 0 : i32
    %c0_i32_1 = arith.constant 0 : i32
    return %c0_i32, %c0_i32_0 : i32, i32
  }
  func.func @transform_7(%arg0: i32) -> (i32, i32) {
    %c0_i32 = arith.constant 0 : i32
    %c0_i32_0 = arith.constant 0 : i32
    %c0_i32_1 = arith.constant 0 : i32
    return %c0_i32, %c0_i32_0 : i32, i32
  }
  func.func @transform_8(%arg0: i32) -> (i32, i32) {
    %c0_i32 = arith.constant 0 : i32
    %c0_i32_0 = arith.constant 0 : i32
    %c0_i32_1 = arith.constant 0 : i32
    return %c0_i32, %c0_i32_0 : i32, i32
  }
  func.func @transform_9(%arg0: i32) -> (i32, i32) {
    %c0_i32 = arith.constant 0 : i32
    %c0_i32_0 = arith.constant 0 : i32
    %c0_i32_1 = arith.constant 0 : i32
    return %c0_i32, %c0_i32_0 : i32, i32
  }
  func.func @transform_10(%arg0: i32) -> (i32, i32, i32) {
    %c0_i32 = arith.constant 0 : i32
    %c0_i32_0 = arith.constant 0 : i32
    %c0_i32_1 = arith.constant 0 : i32
    return %arg0, %c0_i32, %c0_i32_0 : i32, i32, i32
  }
  func.func @transform_11(%arg0: i32) -> (i32, i32) {
    %c0_i32 = arith.constant 0 : i32
    %c0_i32_0 = arith.constant 0 : i32
    return %arg0, %c0_i32 : i32, i32
  }
}

module attributes {stable_mosaic.version = 11 : i64} {
  func.func @_rnn_avg_kernel(%arg0: memref<8x2x128xf32, #tpu.memory_space<vmem>>, %arg1: memref<8x1x2xf32, #tpu.memory_space<vmem>>, %arg2: memref<128x128xf32, #tpu.memory_space<vmem>>, %arg3: memref<1x128xf32, #tpu.memory_space<vmem>>, %arg4: memref<1x1xf32, #tpu.memory_space<vmem>>, %arg5: memref<8x1x2xf32, #tpu.memory_space<vmem>>, %arg6: memref<2x128xf32, #tpu.memory_space<vmem>>, %arg7: memref<8x1x2xf32, #tpu.memory_space<vmem>>) attributes {dimension_semantics = [], scalar_prefetch = 0 : i64, scratch_operands = 2 : i64, tpu.core_type = #tpu.core_type<tc>} {
    %c0 = arith.constant 0 : index
    %c0_0 = arith.constant 0 : index
    %0 = vector.load %arg2[%c0, %c0_0] : memref<128x128xf32, #tpu.memory_space<vmem>>, vector<128x128xf32>
    %c0_1 = arith.constant 0 : index
    %c0_2 = arith.constant 0 : index
    %1 = vector.load %arg3[%c0_1, %c0_2] : memref<1x128xf32, #tpu.memory_space<vmem>>, vector<1x128xf32>
    %c0_3 = arith.constant 0 : index
    %c0_4 = arith.constant 0 : index
    %2 = vector.load %arg4[%c0_3, %c0_4] : memref<1x1xf32, #tpu.memory_space<vmem>>, vector<1x1xf32>
    %cst = arith.constant 0.000000e+00 : f32
    %3 = vector.broadcast %cst : f32 to vector<2x128xf32>
    %c0_5 = arith.constant 0 : index
    %c0_6 = arith.constant 0 : index
    %4 = vector.load %arg6[%c0_5, %c0_6] : memref<2x128xf32, #tpu.memory_space<vmem>>, vector<2x128xf32>
    tpu.vector_store %arg6[%c0_5, %c0_6], %3 {strides = array<i32>} : memref<2x128xf32, #tpu.memory_space<vmem>>, vector<2x128xf32>,
    %c0_i32 = arith.constant 0 : i32
    %c1_i32 = arith.constant 1 : i32
    %5 = arith.muli %c0_i32, %c1_i32 : i32
    %c0_i32_7 = arith.constant 0 : i32
    %6 = arith.addi %c0_i32_7, %5 : i32
    %7 = arith.index_cast %6 : i32 to index
    %c0_8 = arith.constant 0 : index
    %c0_9 = arith.constant 0 : index
    %8 = vector.load %arg0[%7, %c0_8, %c0_9] : memref<8x2x128xf32, #tpu.memory_space<vmem>>, vector<1x2x128xf32>
    %9 = vector.shape_cast %8 : vector<1x2x128xf32> to vector<2x128xf32>
    %c0_10 = arith.constant 0 : index
    %c0_11 = arith.constant 0 : index
    %10 = vector.load %arg6[%c0_10, %c0_11] : memref<2x128xf32, #tpu.memory_space<vmem>>, vector<2x128xf32>
    %cst_12 = arith.constant dense<0.000000e+00> : vector<2x128xf32>
    %11 = tpu.matmul %10, %0, %cst_12 {dimension_numbers = #tpu.dot_dimension_numbers<[1], [0], [0], [1], [0, 0, 1, 1], [], []>} : vector<2x128xf32>, vector<128x128xf32>, vector<2x128xf32> -> vector<2x128xf32>
    %12 = arith.addf %9, %11 : vector<2x128xf32>
    %13 = math.tanh %12 : vector<2x128xf32>
    %c0_13 = arith.constant 0 : index
    %c0_14 = arith.constant 0 : index
    %14 = vector.load %arg6[%c0_13, %c0_14] : memref<2x128xf32, #tpu.memory_space<vmem>>, vector<2x128xf32>
    tpu.vector_store %arg6[%c0_13, %c0_14], %13 {strides = array<i32>} : memref<2x128xf32, #tpu.memory_space<vmem>>, vector<2x128xf32>,
    %15 = vector.broadcast %1 : vector<1x128xf32> to vector<2x128xf32>
    %16 = arith.mulf %13, %15 : vector<2x128xf32>
    %cst_15 = arith.constant dense<0.000000e+00> : vector<2xf32>
    %17 = vector.multi_reduction <add>, %16, %cst_15 [1] : vector<2x128xf32> to vector<2xf32>
    %18 = vector.shape_cast %17 : vector<2xf32> to vector<1x2xf32>
    %19 = vector.broadcast %2 : vector<1x1xf32> to vector<1x2xf32>
    %20 = arith.addf %18, %19 : vector<1x2xf32>
    %21 = arith.negf %20 : vector<1x2xf32>
    %22 = math.exp %21 : vector<1x2xf32>
    %cst_16 = arith.constant 1.000000e+00 : f32
    %23 = vector.broadcast %cst_16 : f32 to vector<1x2xf32>
    %24 = arith.addf %23, %22 : vector<1x2xf32>
    %25 = arith.divf %23, %24 : vector<1x2xf32>
    %26 = arith.index_cast %6 : i32 to index
    %c0_17 = arith.constant 0 : index
    %c0_18 = arith.constant 0 : index
    %27 = vector.load %arg7[%26, %c0_17, %c0_18] : memref<8x1x2xf32, #tpu.memory_space<vmem>>, vector<1x1x2xf32>
    %28 = vector.shape_cast %27 : vector<1x1x2xf32> to vector<1x2xf32>
    %29 = vector.shape_cast %25 : vector<1x2xf32> to vector<1x1x2xf32>
    tpu.vector_store %arg7[%26, %c0_17, %c0_18], %29 {strides = array<i32>} : memref<8x1x2xf32, #tpu.memory_space<vmem>>, vector<1x1x2xf32>,
    %c1_i32_19 = arith.constant 1 : i32
    %c1_i32_20 = arith.constant 1 : i32
    %30 = arith.muli %c1_i32_19, %c1_i32_20 : i32
    %c0_i32_21 = arith.constant 0 : i32
    %31 = arith.addi %c0_i32_21, %30 : i32
    %32 = arith.index_cast %31 : i32 to index
    %c0_22 = arith.constant 0 : index
    %c0_23 = arith.constant 0 : index
    %33 = vector.load %arg0[%32, %c0_22, %c0_23] : memref<8x2x128xf32, #tpu.memory_space<vmem>>, vector<1x2x128xf32>
    %34 = vector.shape_cast %33 : vector<1x2x128xf32> to vector<2x128xf32>
    %c0_24 = arith.constant 0 : index
    %c0_25 = arith.constant 0 : index
    %35 = vector.load %arg6[%c0_24, %c0_25] : memref<2x128xf32, #tpu.memory_space<vmem>>, vector<2x128xf32>
    %cst_26 = arith.constant dense<0.000000e+00> : vector<2x128xf32>
    %36 = tpu.matmul %35, %0, %cst_26 {dimension_numbers = #tpu.dot_dimension_numbers<[1], [0], [0], [1], [0, 0, 1, 1], [], []>} : vector<2x128xf32>, vector<128x128xf32>, vector<2x128xf32> -> vector<2x128xf32>
    %37 = arith.addf %34, %36 : vector<2x128xf32>
    %38 = math.tanh %37 : vector<2x128xf32>
    %c0_27 = arith.constant 0 : index
    %c0_28 = arith.constant 0 : index
    %39 = vector.load %arg6[%c0_27, %c0_28] : memref<2x128xf32, #tpu.memory_space<vmem>>, vector<2x128xf32>
    tpu.vector_store %arg6[%c0_27, %c0_28], %38 {strides = array<i32>} : memref<2x128xf32, #tpu.memory_space<vmem>>, vector<2x128xf32>,
    %40 = vector.broadcast %1 : vector<1x128xf32> to vector<2x128xf32>
    %41 = arith.mulf %38, %40 : vector<2x128xf32>
    %cst_29 = arith.constant dense<0.000000e+00> : vector<2xf32>
    %42 = vector.multi_reduction <add>, %41, %cst_29 [1] : vector<2x128xf32> to vector<2xf32>
    %43 = vector.shape_cast %42 : vector<2xf32> to vector<1x2xf32>
    %44 = vector.broadcast %2 : vector<1x1xf32> to vector<1x2xf32>
    %45 = arith.addf %43, %44 : vector<1x2xf32>
    %46 = arith.negf %45 : vector<1x2xf32>
    %47 = math.exp %46 : vector<1x2xf32>
    %cst_30 = arith.constant 1.000000e+00 : f32
    %48 = vector.broadcast %cst_30 : f32 to vector<1x2xf32>
    %49 = arith.addf %48, %47 : vector<1x2xf32>
    %50 = arith.divf %48, %49 : vector<1x2xf32>
    %51 = arith.index_cast %31 : i32 to index
    %c0_31 = arith.constant 0 : index
    %c0_32 = arith.constant 0 : index
    %52 = vector.load %arg7[%51, %c0_31, %c0_32] : memref<8x1x2xf32, #tpu.memory_space<vmem>>, vector<1x1x2xf32>
    %53 = vector.shape_cast %52 : vector<1x1x2xf32> to vector<1x2xf32>
    %54 = vector.shape_cast %50 : vector<1x2xf32> to vector<1x1x2xf32>
    tpu.vector_store %arg7[%51, %c0_31, %c0_32], %54 {strides = array<i32>} : memref<8x1x2xf32, #tpu.memory_space<vmem>>, vector<1x1x2xf32>,
    %c2_i32 = arith.constant 2 : i32
    %c1_i32_33 = arith.constant 1 : i32
    %55 = arith.muli %c2_i32, %c1_i32_33 : i32
    %c0_i32_34 = arith.constant 0 : i32
    %56 = arith.addi %c0_i32_34, %55 : i32
    %57 = arith.index_cast %56 : i32 to index
    %c0_35 = arith.constant 0 : index
    %c0_36 = arith.constant 0 : index
    %58 = vector.load %arg0[%57, %c0_35, %c0_36] : memref<8x2x128xf32, #tpu.memory_space<vmem>>, vector<1x2x128xf32>
    %59 = vector.shape_cast %58 : vector<1x2x128xf32> to vector<2x128xf32>
    %c0_37 = arith.constant 0 : index
    %c0_38 = arith.constant 0 : index
    %60 = vector.load %arg6[%c0_37, %c0_38] : memref<2x128xf32, #tpu.memory_space<vmem>>, vector<2x128xf32>
    %cst_39 = arith.constant dense<0.000000e+00> : vector<2x128xf32>
    %61 = tpu.matmul %60, %0, %cst_39 {dimension_numbers = #tpu.dot_dimension_numbers<[1], [0], [0], [1], [0, 0, 1, 1], [], []>} : vector<2x128xf32>, vector<128x128xf32>, vector<2x128xf32> -> vector<2x128xf32>
    %62 = arith.addf %59, %61 : vector<2x128xf32>
    %63 = math.tanh %62 : vector<2x128xf32>
    %c0_40 = arith.constant 0 : index
    %c0_41 = arith.constant 0 : index
    %64 = vector.load %arg6[%c0_40, %c0_41] : memref<2x128xf32, #tpu.memory_space<vmem>>, vector<2x128xf32>
    tpu.vector_store %arg6[%c0_40, %c0_41], %63 {strides = array<i32>} : memref<2x128xf32, #tpu.memory_space<vmem>>, vector<2x128xf32>,
    %65 = vector.broadcast %1 : vector<1x128xf32> to vector<2x128xf32>
    %66 = arith.mulf %63, %65 : vector<2x128xf32>
    %cst_42 = arith.constant dense<0.000000e+00> : vector<2xf32>
    %67 = vector.multi_reduction <add>, %66, %cst_42 [1] : vector<2x128xf32> to vector<2xf32>
    %68 = vector.shape_cast %67 : vector<2xf32> to vector<1x2xf32>
    %69 = vector.broadcast %2 : vector<1x1xf32> to vector<1x2xf32>
    %70 = arith.addf %68, %69 : vector<1x2xf32>
    %71 = arith.negf %70 : vector<1x2xf32>
    %72 = math.exp %71 : vector<1x2xf32>
    %cst_43 = arith.constant 1.000000e+00 : f32
    %73 = vector.broadcast %cst_43 : f32 to vector<1x2xf32>
    %74 = arith.addf %73, %72 : vector<1x2xf32>
    %75 = arith.divf %73, %74 : vector<1x2xf32>
    %76 = arith.index_cast %56 : i32 to index
    %c0_44 = arith.constant 0 : index
    %c0_45 = arith.constant 0 : index
    %77 = vector.load %arg7[%76, %c0_44, %c0_45] : memref<8x1x2xf32, #tpu.memory_space<vmem>>, vector<1x1x2xf32>
    %78 = vector.shape_cast %77 : vector<1x1x2xf32> to vector<1x2xf32>
    %79 = vector.shape_cast %75 : vector<1x2xf32> to vector<1x1x2xf32>
    tpu.vector_store %arg7[%76, %c0_44, %c0_45], %79 {strides = array<i32>} : memref<8x1x2xf32, #tpu.memory_space<vmem>>, vector<1x1x2xf32>,
    %c3_i32 = arith.constant 3 : i32
    %c1_i32_46 = arith.constant 1 : i32
    %80 = arith.muli %c3_i32, %c1_i32_46 : i32
    %c0_i32_47 = arith.constant 0 : i32
    %81 = arith.addi %c0_i32_47, %80 : i32
    %82 = arith.index_cast %81 : i32 to index
    %c0_48 = arith.constant 0 : index
    %c0_49 = arith.constant 0 : index
    %83 = vector.load %arg0[%82, %c0_48, %c0_49] : memref<8x2x128xf32, #tpu.memory_space<vmem>>, vector<1x2x128xf32>
    %84 = vector.shape_cast %83 : vector<1x2x128xf32> to vector<2x128xf32>
    %c0_50 = arith.constant 0 : index
    %c0_51 = arith.constant 0 : index
    %85 = vector.load %arg6[%c0_50, %c0_51] : memref<2x128xf32, #tpu.memory_space<vmem>>, vector<2x128xf32>
    %cst_52 = arith.constant dense<0.000000e+00> : vector<2x128xf32>
    %86 = tpu.matmul %85, %0, %cst_52 {dimension_numbers = #tpu.dot_dimension_numbers<[1], [0], [0], [1], [0, 0, 1, 1], [], []>} : vector<2x128xf32>, vector<128x128xf32>, vector<2x128xf32> -> vector<2x128xf32>
    %87 = arith.addf %84, %86 : vector<2x128xf32>
    %88 = math.tanh %87 : vector<2x128xf32>
    %c0_53 = arith.constant 0 : index
    %c0_54 = arith.constant 0 : index
    %89 = vector.load %arg6[%c0_53, %c0_54] : memref<2x128xf32, #tpu.memory_space<vmem>>, vector<2x128xf32>
    tpu.vector_store %arg6[%c0_53, %c0_54], %88 {strides = array<i32>} : memref<2x128xf32, #tpu.memory_space<vmem>>, vector<2x128xf32>,
    %90 = vector.broadcast %1 : vector<1x128xf32> to vector<2x128xf32>
    %91 = arith.mulf %88, %90 : vector<2x128xf32>
    %cst_55 = arith.constant dense<0.000000e+00> : vector<2xf32>
    %92 = vector.multi_reduction <add>, %91, %cst_55 [1] : vector<2x128xf32> to vector<2xf32>
    %93 = vector.shape_cast %92 : vector<2xf32> to vector<1x2xf32>
    %94 = vector.broadcast %2 : vector<1x1xf32> to vector<1x2xf32>
    %95 = arith.addf %93, %94 : vector<1x2xf32>
    %96 = arith.negf %95 : vector<1x2xf32>
    %97 = math.exp %96 : vector<1x2xf32>
    %cst_56 = arith.constant 1.000000e+00 : f32
    %98 = vector.broadcast %cst_56 : f32 to vector<1x2xf32>
    %99 = arith.addf %98, %97 : vector<1x2xf32>
    %100 = arith.divf %98, %99 : vector<1x2xf32>
    %101 = arith.index_cast %81 : i32 to index
    %c0_57 = arith.constant 0 : index
    %c0_58 = arith.constant 0 : index
    %102 = vector.load %arg7[%101, %c0_57, %c0_58] : memref<8x1x2xf32, #tpu.memory_space<vmem>>, vector<1x1x2xf32>
    %103 = vector.shape_cast %102 : vector<1x1x2xf32> to vector<1x2xf32>
    %104 = vector.shape_cast %100 : vector<1x2xf32> to vector<1x1x2xf32>
    tpu.vector_store %arg7[%101, %c0_57, %c0_58], %104 {strides = array<i32>} : memref<8x1x2xf32, #tpu.memory_space<vmem>>, vector<1x1x2xf32>,
    %c4_i32 = arith.constant 4 : i32
    %c1_i32_59 = arith.constant 1 : i32
    %105 = arith.muli %c4_i32, %c1_i32_59 : i32
    %c0_i32_60 = arith.constant 0 : i32
    %106 = arith.addi %c0_i32_60, %105 : i32
    %107 = arith.index_cast %106 : i32 to index
    %c0_61 = arith.constant 0 : index
    %c0_62 = arith.constant 0 : index
    %108 = vector.load %arg0[%107, %c0_61, %c0_62] : memref<8x2x128xf32, #tpu.memory_space<vmem>>, vector<1x2x128xf32>
    %109 = vector.shape_cast %108 : vector<1x2x128xf32> to vector<2x128xf32>
    %c0_63 = arith.constant 0 : index
    %c0_64 = arith.constant 0 : index
    %110 = vector.load %arg6[%c0_63, %c0_64] : memref<2x128xf32, #tpu.memory_space<vmem>>, vector<2x128xf32>
    %cst_65 = arith.constant dense<0.000000e+00> : vector<2x128xf32>
    %111 = tpu.matmul %110, %0, %cst_65 {dimension_numbers = #tpu.dot_dimension_numbers<[1], [0], [0], [1], [0, 0, 1, 1], [], []>} : vector<2x128xf32>, vector<128x128xf32>, vector<2x128xf32> -> vector<2x128xf32>
    %112 = arith.addf %109, %111 : vector<2x128xf32>
    %113 = math.tanh %112 : vector<2x128xf32>
    %c0_66 = arith.constant 0 : index
    %c0_67 = arith.constant 0 : index
    %114 = vector.load %arg6[%c0_66, %c0_67] : memref<2x128xf32, #tpu.memory_space<vmem>>, vector<2x128xf32>
    tpu.vector_store %arg6[%c0_66, %c0_67], %113 {strides = array<i32>} : memref<2x128xf32, #tpu.memory_space<vmem>>, vector<2x128xf32>,
    %115 = vector.broadcast %1 : vector<1x128xf32> to vector<2x128xf32>
    %116 = arith.mulf %113, %115 : vector<2x128xf32>
    %cst_68 = arith.constant dense<0.000000e+00> : vector<2xf32>
    %117 = vector.multi_reduction <add>, %116, %cst_68 [1] : vector<2x128xf32> to vector<2xf32>
    %118 = vector.shape_cast %117 : vector<2xf32> to vector<1x2xf32>
    %119 = vector.broadcast %2 : vector<1x1xf32> to vector<1x2xf32>
    %120 = arith.addf %118, %119 : vector<1x2xf32>
    %121 = arith.negf %120 : vector<1x2xf32>
    %122 = math.exp %121 : vector<1x2xf32>
    %cst_69 = arith.constant 1.000000e+00 : f32
    %123 = vector.broadcast %cst_69 : f32 to vector<1x2xf32>
    %124 = arith.addf %123, %122 : vector<1x2xf32>
    %125 = arith.divf %123, %124 : vector<1x2xf32>
    %126 = arith.index_cast %106 : i32 to index
    %c0_70 = arith.constant 0 : index
    %c0_71 = arith.constant 0 : index
    %127 = vector.load %arg7[%126, %c0_70, %c0_71] : memref<8x1x2xf32, #tpu.memory_space<vmem>>, vector<1x1x2xf32>
    %128 = vector.shape_cast %127 : vector<1x1x2xf32> to vector<1x2xf32>
    %129 = vector.shape_cast %125 : vector<1x2xf32> to vector<1x1x2xf32>
    tpu.vector_store %arg7[%126, %c0_70, %c0_71], %129 {strides = array<i32>} : memref<8x1x2xf32, #tpu.memory_space<vmem>>, vector<1x1x2xf32>,
    %c5_i32 = arith.constant 5 : i32
    %c1_i32_72 = arith.constant 1 : i32
    %130 = arith.muli %c5_i32, %c1_i32_72 : i32
    %c0_i32_73 = arith.constant 0 : i32
    %131 = arith.addi %c0_i32_73, %130 : i32
    %132 = arith.index_cast %131 : i32 to index
    %c0_74 = arith.constant 0 : index
    %c0_75 = arith.constant 0 : index
    %133 = vector.load %arg0[%132, %c0_74, %c0_75] : memref<8x2x128xf32, #tpu.memory_space<vmem>>, vector<1x2x128xf32>
    %134 = vector.shape_cast %133 : vector<1x2x128xf32> to vector<2x128xf32>
    %c0_76 = arith.constant 0 : index
    %c0_77 = arith.constant 0 : index
    %135 = vector.load %arg6[%c0_76, %c0_77] : memref<2x128xf32, #tpu.memory_space<vmem>>, vector<2x128xf32>
    %cst_78 = arith.constant dense<0.000000e+00> : vector<2x128xf32>
    %136 = tpu.matmul %135, %0, %cst_78 {dimension_numbers = #tpu.dot_dimension_numbers<[1], [0], [0], [1], [0, 0, 1, 1], [], []>} : vector<2x128xf32>, vector<128x128xf32>, vector<2x128xf32> -> vector<2x128xf32>
    %137 = arith.addf %134, %136 : vector<2x128xf32>
    %138 = math.tanh %137 : vector<2x128xf32>
    %c0_79 = arith.constant 0 : index
    %c0_80 = arith.constant 0 : index
    %139 = vector.load %arg6[%c0_79, %c0_80] : memref<2x128xf32, #tpu.memory_space<vmem>>, vector<2x128xf32>
    tpu.vector_store %arg6[%c0_79, %c0_80], %138 {strides = array<i32>} : memref<2x128xf32, #tpu.memory_space<vmem>>, vector<2x128xf32>,
    %140 = vector.broadcast %1 : vector<1x128xf32> to vector<2x128xf32>
    %141 = arith.mulf %138, %140 : vector<2x128xf32>
    %cst_81 = arith.constant dense<0.000000e+00> : vector<2xf32>
    %142 = vector.multi_reduction <add>, %141, %cst_81 [1] : vector<2x128xf32> to vector<2xf32>
    %143 = vector.shape_cast %142 : vector<2xf32> to vector<1x2xf32>
    %144 = vector.broadcast %2 : vector<1x1xf32> to vector<1x2xf32>
    %145 = arith.addf %143, %144 : vector<1x2xf32>
    %146 = arith.negf %145 : vector<1x2xf32>
    %147 = math.exp %146 : vector<1x2xf32>
    %cst_82 = arith.constant 1.000000e+00 : f32
    %148 = vector.broadcast %cst_82 : f32 to vector<1x2xf32>
    %149 = arith.addf %148, %147 : vector<1x2xf32>
    %150 = arith.divf %148, %149 : vector<1x2xf32>
    %151 = arith.index_cast %131 : i32 to index
    %c0_83 = arith.constant 0 : index
    %c0_84 = arith.constant 0 : index
    %152 = vector.load %arg7[%151, %c0_83, %c0_84] : memref<8x1x2xf32, #tpu.memory_space<vmem>>, vector<1x1x2xf32>
    %153 = vector.shape_cast %152 : vector<1x1x2xf32> to vector<1x2xf32>
    %154 = vector.shape_cast %150 : vector<1x2xf32> to vector<1x1x2xf32>
    tpu.vector_store %arg7[%151, %c0_83, %c0_84], %154 {strides = array<i32>} : memref<8x1x2xf32, #tpu.memory_space<vmem>>, vector<1x1x2xf32>,
    %c6_i32 = arith.constant 6 : i32
    %c1_i32_85 = arith.constant 1 : i32
    %155 = arith.muli %c6_i32, %c1_i32_85 : i32
    %c0_i32_86 = arith.constant 0 : i32
    %156 = arith.addi %c0_i32_86, %155 : i32
    %157 = arith.index_cast %156 : i32 to index
    %c0_87 = arith.constant 0 : index
    %c0_88 = arith.constant 0 : index
    %158 = vector.load %arg0[%157, %c0_87, %c0_88] : memref<8x2x128xf32, #tpu.memory_space<vmem>>, vector<1x2x128xf32>
    %159 = vector.shape_cast %158 : vector<1x2x128xf32> to vector<2x128xf32>
    %c0_89 = arith.constant 0 : index
    %c0_90 = arith.constant 0 : index
    %160 = vector.load %arg6[%c0_89, %c0_90] : memref<2x128xf32, #tpu.memory_space<vmem>>, vector<2x128xf32>
    %cst_91 = arith.constant dense<0.000000e+00> : vector<2x128xf32>
    %161 = tpu.matmul %160, %0, %cst_91 {dimension_numbers = #tpu.dot_dimension_numbers<[1], [0], [0], [1], [0, 0, 1, 1], [], []>} : vector<2x128xf32>, vector<128x128xf32>, vector<2x128xf32> -> vector<2x128xf32>
    %162 = arith.addf %159, %161 : vector<2x128xf32>
    %163 = math.tanh %162 : vector<2x128xf32>
    %c0_92 = arith.constant 0 : index
    %c0_93 = arith.constant 0 : index
    %164 = vector.load %arg6[%c0_92, %c0_93] : memref<2x128xf32, #tpu.memory_space<vmem>>, vector<2x128xf32>
    tpu.vector_store %arg6[%c0_92, %c0_93], %163 {strides = array<i32>} : memref<2x128xf32, #tpu.memory_space<vmem>>, vector<2x128xf32>,
    %165 = vector.broadcast %1 : vector<1x128xf32> to vector<2x128xf32>
    %166 = arith.mulf %163, %165 : vector<2x128xf32>
    %cst_94 = arith.constant dense<0.000000e+00> : vector<2xf32>
    %167 = vector.multi_reduction <add>, %166, %cst_94 [1] : vector<2x128xf32> to vector<2xf32>
    %168 = vector.shape_cast %167 : vector<2xf32> to vector<1x2xf32>
    %169 = vector.broadcast %2 : vector<1x1xf32> to vector<1x2xf32>
    %170 = arith.addf %168, %169 : vector<1x2xf32>
    %171 = arith.negf %170 : vector<1x2xf32>
    %172 = math.exp %171 : vector<1x2xf32>
    %cst_95 = arith.constant 1.000000e+00 : f32
    %173 = vector.broadcast %cst_95 : f32 to vector<1x2xf32>
    %174 = arith.addf %173, %172 : vector<1x2xf32>
    %175 = arith.divf %173, %174 : vector<1x2xf32>
    %176 = arith.index_cast %156 : i32 to index
    %c0_96 = arith.constant 0 : index
    %c0_97 = arith.constant 0 : index
    %177 = vector.load %arg7[%176, %c0_96, %c0_97] : memref<8x1x2xf32, #tpu.memory_space<vmem>>, vector<1x1x2xf32>
    %178 = vector.shape_cast %177 : vector<1x1x2xf32> to vector<1x2xf32>
    %179 = vector.shape_cast %175 : vector<1x2xf32> to vector<1x1x2xf32>
    tpu.vector_store %arg7[%176, %c0_96, %c0_97], %179 {strides = array<i32>} : memref<8x1x2xf32, #tpu.memory_space<vmem>>, vector<1x1x2xf32>,
    %c7_i32 = arith.constant 7 : i32
    %c1_i32_98 = arith.constant 1 : i32
    %180 = arith.muli %c7_i32, %c1_i32_98 : i32
    %c0_i32_99 = arith.constant 0 : i32
    %181 = arith.addi %c0_i32_99, %180 : i32
    %182 = arith.index_cast %181 : i32 to index
    %c0_100 = arith.constant 0 : index
    %c0_101 = arith.constant 0 : index
    %183 = vector.load %arg0[%182, %c0_100, %c0_101] : memref<8x2x128xf32, #tpu.memory_space<vmem>>, vector<1x2x128xf32>
    %184 = vector.shape_cast %183 : vector<1x2x128xf32> to vector<2x128xf32>
    %c0_102 = arith.constant 0 : index
    %c0_103 = arith.constant 0 : index
    %185 = vector.load %arg6[%c0_102, %c0_103] : memref<2x128xf32, #tpu.memory_space<vmem>>, vector<2x128xf32>
    %cst_104 = arith.constant dense<0.000000e+00> : vector<2x128xf32>
    %186 = tpu.matmul %185, %0, %cst_104 {dimension_numbers = #tpu.dot_dimension_numbers<[1], [0], [0], [1], [0, 0, 1, 1], [], []>} : vector<2x128xf32>, vector<128x128xf32>, vector<2x128xf32> -> vector<2x128xf32>
    %187 = arith.addf %184, %186 : vector<2x128xf32>
    %188 = math.tanh %187 : vector<2x128xf32>
    %c0_105 = arith.constant 0 : index
    %c0_106 = arith.constant 0 : index
    %189 = vector.load %arg6[%c0_105, %c0_106] : memref<2x128xf32, #tpu.memory_space<vmem>>, vector<2x128xf32>
    tpu.vector_store %arg6[%c0_105, %c0_106], %188 {strides = array<i32>} : memref<2x128xf32, #tpu.memory_space<vmem>>, vector<2x128xf32>,
    %190 = vector.broadcast %1 : vector<1x128xf32> to vector<2x128xf32>
    %191 = arith.mulf %188, %190 : vector<2x128xf32>
    %cst_107 = arith.constant dense<0.000000e+00> : vector<2xf32>
    %192 = vector.multi_reduction <add>, %191, %cst_107 [1] : vector<2x128xf32> to vector<2xf32>
    %193 = vector.shape_cast %192 : vector<2xf32> to vector<1x2xf32>
    %194 = vector.broadcast %2 : vector<1x1xf32> to vector<1x2xf32>
    %195 = arith.addf %193, %194 : vector<1x2xf32>
    %196 = arith.negf %195 : vector<1x2xf32>
    %197 = math.exp %196 : vector<1x2xf32>
    %cst_108 = arith.constant 1.000000e+00 : f32
    %198 = vector.broadcast %cst_108 : f32 to vector<1x2xf32>
    %199 = arith.addf %198, %197 : vector<1x2xf32>
    %200 = arith.divf %198, %199 : vector<1x2xf32>
    %201 = arith.index_cast %181 : i32 to index
    %c0_109 = arith.constant 0 : index
    %c0_110 = arith.constant 0 : index
    %202 = vector.load %arg7[%201, %c0_109, %c0_110] : memref<8x1x2xf32, #tpu.memory_space<vmem>>, vector<1x1x2xf32>
    %203 = vector.shape_cast %202 : vector<1x1x2xf32> to vector<1x2xf32>
    %204 = vector.shape_cast %200 : vector<1x2xf32> to vector<1x1x2xf32>
    tpu.vector_store %arg7[%201, %c0_109, %c0_110], %204 {strides = array<i32>} : memref<8x1x2xf32, #tpu.memory_space<vmem>>, vector<1x1x2xf32>,
    %c8_i32 = arith.constant 8 : i32
    %c0_111 = arith.constant 0 : index
    %c0_112 = arith.constant 0 : index
    %c0_113 = arith.constant 0 : index
    %205 = vector.load %arg7[%c0_111, %c0_112, %c0_113] : memref<8x1x2xf32, #tpu.memory_space<vmem>>, vector<8x1x2xf32>
    %c0_114 = arith.constant 0 : index
    %c0_115 = arith.constant 0 : index
    %c0_116 = arith.constant 0 : index
    %206 = vector.load %arg1[%c0_114, %c0_115, %c0_116] : memref<8x1x2xf32, #tpu.memory_space<vmem>>, vector<8x1x2xf32>
    %207 = arith.addf %205, %206 : vector<8x1x2xf32>
    %cst_117 = arith.constant 5.000000e-01 : f32
    %208 = vector.broadcast %cst_117 : f32 to vector<8x1x2xf32>
    %209 = arith.mulf %207, %208 : vector<8x1x2xf32>
    %c0_118 = arith.constant 0 : index
    %c0_119 = arith.constant 0 : index
    %c0_120 = arith.constant 0 : index
    %210 = vector.load %arg5[%c0_118, %c0_119, %c0_120] : memref<8x1x2xf32, #tpu.memory_space<vmem>>, vector<8x1x2xf32>
    tpu.vector_store %arg5[%c0_118, %c0_119, %c0_120], %209 {strides = array<i32>} : memref<8x1x2xf32, #tpu.memory_space<vmem>>, vector<8x1x2xf32>,
    return
  }
}

</mosaic_0001>

<llo_original>
// kernel: seq_in_site_forward.2
$region0: #{seq_in_site_forward.2}
  #allocation0 [shape = 'u32[]', space=smem, size = 0x4, offset = 0x4, fixed_abs, tag = 'smem constant byte address 0x4 - core index']
  #allocation1 [shape = 'u32[144,128]{1,0:T(1,128)}', space=vmem, size = 0x12000, scoped, tag = 'internal scratch']
  #allocation2 [shape = 'f32[1,1]{1,0:T(1,128)S(1)}', space=vmem, size = 0x200, scoped, tag = 'scoped memory for seq_in_site_forward.2']
  %s0 = inlined_call_operand.vmem [shape: f32[16,32], index: 0, kind: input, shape index: {}]
  %s1 = inlined_call_operand.vmem [shape: f32[16,16], index: 1, kind: input, shape index: {}]
  %s2 = inlined_call_operand.vmem [shape: f32[32,128], index: 2, kind: input, shape index: {}]
  %s3 = inlined_call_operand.vmem [shape: f32[16,128], index: 3, kind: input, shape index: {}]
  %s4 = inlined_call_operand.vmem [shape: f32[1,128], index: 4, kind: input, shape index: {}]
  %s5 = inlined_call_operand.vmem [shape: f32[1,128], index: 5, kind: input, shape index: {}]
  %s6 = inlined_call_operand.<no memory space> [shape: f32[1,1], index: 6, kind: input, shape index: {}]
  %s7 = inlined_call_operand.vmem [shape: f32[32,128], index: 7, kind: input, shape index: {}]
  %s8 = inlined_call_operand.vmem [shape: f32[16,128], index: 8, kind: input, shape index: {}]
  %s9 = inlined_call_operand.vmem [shape: f32[1,128], index: 9, kind: input, shape index: {}]
  %s10 = inlined_call_operand.vmem [shape: f32[1,1,16], index: 10, kind: output, shape index: {0}]
  %s11 = inlined_call_operand.vmem [shape: f32[16,128], index: 11, kind: output, shape index: {1}]
  %12 = xla_tuple %s10, %s11
  %s13 = sld [smem:[#allocation0]]
  $region58: #{seq_in_site_forward.2} parent=0
    _
  %s15 = ssub.s32 1, %s13
  %s16 = scalar_select 0, %s15, %s13
  %v17 = vstv %s6
  %18 = vst [vmem:[#allocation2] sm:$0x1] %v17
  // Predicated region
  $region2: #{seq_in_site_forward.2} parent=0 // pred_check
    _
  $region3: #{seq_in_site_forward.2} parent=0 // pred_check_branch
    %20 = sbr.rel (0) target = $region5
  $region4: #{seq_in_site_forward.2} parent=0 // pred_region
    _
  $region5: #{seq_in_site_forward.2} parent=0 // pred_fallthru
    _
  // Predicated region
  $region6: #{seq_in_site_forward.2} parent=0 // pred_check
    _
  $region7: #{seq_in_site_forward.2} parent=0 // pred_check_branch
    %22 = sbr.rel (0) target = $region9
  $region8: #{seq_in_site_forward.2} parent=0 // pred_region
    _
  $region9: #{seq_in_site_forward.2} parent=0 // pred_fallthru
    _
  // Predicated region
  $region10: #{seq_in_site_forward.2} parent=0 // pred_check
    _
  $region11: #{seq_in_site_forward.2} parent=0 // pred_check_branch
    %24 = sbr.rel (0) target = $region13
  $region12: #{seq_in_site_forward.2} parent=0 // pred_region
    _
  $region13: #{seq_in_site_forward.2} parent=0 // pred_fallthru
    _
  // Predicated region
  $region14: #{seq_in_site_forward.2} parent=0 // pred_check
    _
  $region15: #{seq_in_site_forward.2} parent=0 // pred_check_branch
    %26 = sbr.rel (0) target = $region17
  $region16: #{seq_in_site_forward.2} parent=0 // pred_region
    _
  $region17: #{seq_in_site_forward.2} parent=0 // pred_fallthru
    _
  // Predicated region
  $region18: #{seq_in_site_forward.2} parent=0 // pred_check
    _
  $region19: #{seq_in_site_forward.2} parent=0 // pred_check_branch
    %28 = sbr.rel (0) target = $region21
  $region20: #{seq_in_site_forward.2} parent=0 // pred_region
    _
  $region21: #{seq_in_site_forward.2} parent=0 // pred_fallthru
    _
  // Predicated region
  $region22: #{seq_in_site_forward.2} parent=0 // pred_check
    _
  $region23: #{seq_in_site_forward.2} parent=0 // pred_check_branch
    %30 = sbr.rel (0) target = $region25
  $region24: #{seq_in_site_forward.2} parent=0 // pred_region
    _
  $region25: #{seq_in_site_forward.2} parent=0 // pred_fallthru
    _
  // Predicated region
  $region26: #{seq_in_site_forward.2} parent=0 // pred_check
    _
  $region27: #{seq_in_site_forward.2} parent=0 // pred_check_branch
    %32 = sbr.rel (0) target = $region29
  $region28: #{seq_in_site_forward.2} parent=0 // pred_region
    _
  $region29: #{seq_in_site_forward.2} parent=0 // pred_fallthru
    _
  // Predicated region
  $region30: #{seq_in_site_forward.2} parent=0 // pred_check
    _
  $region31: #{seq_in_site_forward.2} parent=0 // pred_check_branch
    %34 = sbr.rel (0) target = $region33
  $region32: #{seq_in_site_forward.2} parent=0 // pred_region
    _
  $region33: #{seq_in_site_forward.2} parent=0 // pred_fallthru
    _
  // Predicated region
  $region34: #{seq_in_site_forward.2} parent=0 // pred_check
    _
  $region35: #{seq_in_site_forward.2} parent=0 // pred_check_branch
    %36 = sbr.rel (0) target = $region37
  $region36: #{seq_in_site_forward.2} parent=0 // pred_region
    _
  $region37: #{seq_in_site_forward.2} parent=0 // pred_fallthru
    _
  // Predicated region
  $region38: #{seq_in_site_forward.2} parent=0 // pred_check
    _
  $region39: #{seq_in_site_forward.2} parent=0 // pred_check_branch
    %38 = sbr.rel (0) target = $region41
  $region40: #{seq_in_site_forward.2} parent=0 // pred_region
    _
  $region41: #{seq_in_site_forward.2} parent=0 // pred_fallthru
    _
  %v39 = vld [vmem:[%s0] sm:$0xff]
  %v40 = vld [vmem:[%s0 + $0x8] sm:$0xff]
  %v41 = vld [vmem:[%s1] sm:$0xff]
  %v42 = vld [vmem:[%s1 + $0x8] sm:$0xff]
  %v43 = vld [vmem:[%s2] sm:$0xff]
  %v44 = vld [vmem:[%s2 + $0x8] sm:$0xff]
  %v45 = vld [vmem:[%s2 + $0x10] sm:$0xff]
  %v46 = vld [vmem:[%s2 + $0x18] sm:$0xff]
  %v47 = vld [vmem:[%s3] sm:$0xff]
  %v48 = vld [vmem:[%s3 + $0x8] sm:$0xff]
  %vm49 = vcmask 130048
  %v51 = vsel %vm49, %v41, 0
  %v54 = vsel %vm49, %v42, 0
  %56 = vmatprep.subr.mxu0 0.0
  %57 = vmatpush1.msra.mxu0 %v47
  %58 = vmatprep.subr.mxu0 0.0
  %59 = vmatpush1.msra.mxu0 %v48
  %60 = vmatprep.subr.mxu0 0.0
  %61 = vmatpush1.msra.mxu0 0.0
  %62 = vmatprep.subr.mxu0 0.0
  %63 = vmatpush1.msra.mxu0 0.0
  %64 = vmatprep.subr.mxu0 0.0
  %65 = vmatpush1.msra.mxu0 0.0
  %66 = vmatprep.subr.mxu0 0.0
  %67 = vmatpush1.msra.mxu0 0.0
  %68 = vmatprep.subr.mxu0 0.0
  %69 = vmatpush1.msra.mxu0 0.0
  %70 = vmatprep.subr.mxu0 0.0
  %71 = vmatpush1.msra.mxu0 0.0
  %72 = vmatprep.subr.mxu0 0.0
  %73 = vmatpush1.msra.mxu0 0.0
  %74 = vmatprep.subr.mxu0 0.0
  %75 = vmatpush1.msra.mxu0 0.0
  %76 = vmatprep.subr.mxu0 0.0
  %77 = vmatpush1.msra.mxu0 0.0
  %78 = vmatprep.subr.mxu0 0.0
  %79 = vmatpush1.msra.mxu0 0.0
  %80 = vmatprep.subr.mxu0 0.0
  %81 = vmatpush1.msra.mxu0 0.0
  %82 = vmatprep.subr.mxu0 0.0
  %83 = vmatpush1.msra.mxu0 0.0
  %84 = vmatprep.subr.mxu0 0.0
  %85 = vmatpush1.msra.mxu0 0.0
  %86 = vmatprep.subr.mxu0 0.0
  %87 = vmatpush1.msra.mxu0 0.0
  %88 = vmatprep.subr.mxu0 0.0
  %89 = vmatpush1.msra.mxu0 0.0
  %90 = vmatprep.subr.mxu0 0.0
  %91 = vmatpush1.msra.mxu0 0.0
  %92 = vmatprep.subr.mxu0 0.0
  %93 = vmatpush1.msra.mxu0 0.0
  %94 = vmatprep.subr.mxu0 0.0
  %95 = vmatpush1.msra.mxu0 0.0
  %96 = vmatprep.subr.mxu0 0.0
  %97 = vmatpush1.msra.mxu0 0.0
  %98 = vmatprep.subr.mxu0 0.0
  %99 = vmatpush1.msra.mxu0 0.0
  %100 = vmatprep.subr.mxu0 0.0
  %101 = vmatpush1.msra.mxu0 0.0
  %102 = vmatprep.subr.mxu0 0.0
  %103 = vmatpush1.msra.mxu0 0.0
  %104 = vmatprep.subr.mxu0 0.0
  %105 = vmatpush1.msra.mxu0 0.0
  %106 = vmatprep.subr.mxu0 0.0
  %107 = vmatpush1.msra.mxu0 0.0
  %108 = vmatprep.subr.mxu0 0.0
  %109 = vmatpush1.msra.mxu0 0.0
  %110 = vmatprep.subr.mxu0 0.0
  %111 = vmatpush1.msra.mxu0 0.0
  %112 = vmatprep.subr.mxu0 0.0
  %113 = vmatpush1.msra.mxu0 0.0
  %114 = vmatprep.subr.mxu0 0.0
  %115 = vmatpush1.msra.mxu0 0.0
  %116 = vmatprep.subr.mxu0 0.0
  %117 = vmatpush1.msra.mxu0 0.0
  %118 = vmatprep.subr.mxu0 0.0
  %119 = vmatpush1.msra.mxu0 0.0
  %120 = vmatprep.mubr.f32.mxu0 0.0
  %121 = vmatmul.mubr.f32.gmra.mrb[0].mxu0 %v51
  %v122 = vpop.f32.mrb[0].mxu0
  %v123 = vadd.f32 0.0, %v122
  %v124 = vpop.f32.mrb[0].mxu0
  %125 = vmatprep.mubr.f32.mxu0 0.0
  %126 = vmatmul.mubr.f32.gmra.mrb[0].mxu0 %v54
  %v127 = vpop.f32.mrb[0].mxu0
  %v128 = vadd.f32 0.0, %v127
  %v129 = vpop.f32.mrb[0].mxu0
  %130 = vdwg.mxu0
  %vm131 = vcmask 261120
  %v133 = vsel %vm131, %v39, 0
  %v136 = vsel %vm131, %v40, 0
  %138 = vmatprep.subr.mxu0 0.0
  %139 = vmatpush1.msra.mxu0 %v43
  %140 = vmatprep.subr.mxu0 0.0
  %141 = vmatpush1.msra.mxu0 %v44
  %142 = vmatprep.subr.mxu0 0.0
  %143 = vmatpush1.msra.mxu0 %v45
  %144 = vmatprep.subr.mxu0 0.0
  %145 = vmatpush1.msra.mxu0 %v46
  %146 = vmatprep.subr.mxu0 0.0
  %147 = vmatpush1.msra.mxu0 0.0
  %148 = vmatprep.subr.mxu0 0.0
  %149 = vmatpush1.msra.mxu0 0.0
  %150 = vmatprep.subr.mxu0 0.0
  %151 = vmatpush1.msra.mxu0 0.0
  %152 = vmatprep.subr.mxu0 0.0
  %153 = vmatpush1.msra.mxu0 0.0
  %154 = vmatprep.subr.mxu0 0.0
  %155 = vmatpush1.msra.mxu0 0.0
  %156 = vmatprep.subr.mxu0 0.0
  %157 = vmatpush1.msra.mxu0 0.0
  %158 = vmatprep.subr.mxu0 0.0
  %159 = vmatpush1.msra.mxu0 0.0
  %160 = vmatprep.subr.mxu0 0.0
  %161 = vmatpush1.msra.mxu0 0.0
  %162 = vmatprep.subr.mxu0 0.0
  %163 = vmatpush1.msra.mxu0 0.0
  %164 = vmatprep.subr.mxu0 0.0
  %165 = vmatpush1.msra.mxu0 0.0
  %166 = vmatprep.subr.mxu0 0.0
  %167 = vmatpush1.msra.mxu0 0.0
  %168 = vmatprep.subr.mxu0 0.0
  %169 = vmatpush1.msra.mxu0 0.0
  %170 = vmatprep.subr.mxu0 0.0
  %171 = vmatpush1.msra.mxu0 0.0
  %172 = vmatprep.subr.mxu0 0.0
  %173 = vmatpush1.msra.mxu0 0.0
  %174 = vmatprep.subr.mxu0 0.0
  %175 = vmatpush1.msra.mxu0 0.0
  %176 = vmatprep.subr.mxu0 0.0
  %177 = vmatpush1.msra.mxu0 0.0
  %178 = vmatprep.subr.mxu0 0.0
  %179 = vmatpush1.msra.mxu0 0.0
  %180 = vmatprep.subr.mxu0 0.0
  %181 = vmatpush1.msra.mxu0 0.0
  %182 = vmatprep.subr.mxu0 0.0
  %183 = vmatpush1.msra.mxu0 0.0
  %184 = vmatprep.subr.mxu0 0.0
  %185 = vmatpush1.msra.mxu0 0.0
  %186 = vmatprep.subr.mxu0 0.0
  %187 = vmatpush1.msra.mxu0 0.0
  %188 = vmatprep.subr.mxu0 0.0
  %189 = vmatpush1.msra.mxu0 0.0
  %190 = vmatprep.subr.mxu0 0.0
  %191 = vmatpush1.msra.mxu0 0.0
  %192 = vmatprep.subr.mxu0 0.0
  %193 = vmatpush1.msra.mxu0 0.0
  %194 = vmatprep.subr.mxu0 0.0
  %195 = vmatpush1.msra.mxu0 0.0
  %196 = vmatprep.subr.mxu0 0.0
  %197 = vmatpush1.msra.mxu0 0.0
  %198 = vmatprep.subr.mxu0 0.0
  %199 = vmatpush1.msra.mxu0 0.0
  %200 = vmatprep.subr.mxu0 0.0
  %201 = vmatpush1.msra.mxu0 0.0
  %202 = vmatprep.mubr.f32.mxu0 0.0
  %203 = vmatmul.mubr.f32.gmra.mrb[0].mxu0 %v133
  %v204 = vpop.f32.mrb[0].mxu0
  %v205 = vadd.f32 %v123, %v204
  %v206 = vpop.f32.mrb[0].mxu0
  %207 = vmatprep.mubr.f32.mxu0 0.0
  %208 = vmatmul.mubr.f32.gmra.mrb[0].mxu0 %v136
  %v209 = vpop.f32.mrb[0].mxu0
  %v210 = vadd.f32 %v128, %v209
  %v211 = vpop.f32.mrb[0].mxu0
  %212 = vdwg.mxu0
  %v213 = vld [vmem:[%s4] sm:$0x1]
  %v215 = vlaneseq
  %v216 = vshrl.u32 %v215, 7
  %v217 = vsub.s32 0, %v216
  %v218 = vrot.slane %v213, %v217
  %v220 = vadd.f32 %v205, %v218
  %v221 = vadd.f32 %v210, %v218
  %v222 = vmax.f32 %v220, 0.0
  %v223 = vmax.f32 %v221, 0.0
  %v224 = vld [vmem:[%s5] sm:$0x1]
  %v226 = vlaneseq
  %v227 = vshrl.u32 %v226, 7
  %v228 = vsub.s32 0, %v227
  %v229 = vrot.slane %v224, %v228
  %v231 = vmul.f32 %v222, %v229
  %v232 = vmul.f32 %v223, %v229
  %233 = vadd.xlane.f32.xlu0 %v231
  %v234 = vpop.xlane.xlu0 %233
  %235 = vadd.xlane.f32.xlu0 %v232
  %v236 = vpop.xlane.xlu0 %235
  %v237 = vld [vmem:[#allocation2] sm:$0x1]
  %239 = vset.pattern.permute.xlu0 0
  %240 = vperm.xlu0 %239, %v237
  %v241 = vpop.permute.xlu0 %240
  %v243 = vlaneseq
  %v244 = vshrl.u32 %v243, 7
  %v245 = vsub.s32 0, %v244
  %v246 = vrot.slane %v241, %v245
  %v247 = vadd.f32 %v234, %v246
  %v248 = vadd.f32 %v236, %v246
  %v249 = vxor.u32 %v247, 2147483648
  %v250 = vxor.u32 %v248, 2147483648
  %v251 = vmul.f32 %v249, 1.442695
  %v252 = vpow.pop %v251
  %v253 = vmul.f32 %v250, 1.442695
  %v254 = vpow.pop %v253
  %v255 = vadd.f32 %v252, 1.0
  %v256 = vadd.f32 %v254, 1.0
  %v257 = vrcp.pop %v255
  %v258 = vmul.f32 1.0, %v257
  %v259 = vrcp.pop %v256
  %v260 = vmul.f32 1.0, %v259
  %v263 = vlaneseq
  %v264 = vand.u32 %v263, 127
  %v265 = vlaneseq
  %v266 = vshrl.u32 %v265, 7
  %v267 = vsub.s32 %v264, %v266
  %v268 = vrot.slane %v258, %v267
  %v269 = vadd.s32 %v264, 4294967288
  %v270 = vlaneseq
  %v271 = vshrl.u32 %v270, 7
  %v272 = vsub.s32 %v269, %v271
  %v273 = vrot.slane %v260, %v272
  %vm274 = vcmask 130112
  %v275 = vsel %vm274, %v273, %v268
  %vm277 = vcmask 122880
  %278 = vst.msk [vmem:[%s10] sm:$0x1] %vm277, %v275
  %v279 = vld [vmem:[%s7] sm:$0xff]
  %v280 = vld [vmem:[%s7 + $0x8] sm:$0xff]
  %v281 = vld [vmem:[%s7 + $0x10] sm:$0xff]
  %v282 = vld [vmem:[%s7 + $0x18] sm:$0xff]
  %v283 = vld [vmem:[%s8] sm:$0xff]
  %v284 = vld [vmem:[%s8 + $0x8] sm:$0xff]
  %285 = vmatprep.subr.mxu0 0.0
  %286 = vmatpush1.msra.mxu0 %v283
  %287 = vmatprep.subr.mxu0 0.0
  %288 = vmatpush1.msra.mxu0 %v284
  %289 = vmatprep.subr.mxu0 0.0
  %290 = vmatpush1.msra.mxu0 0.0
  %291 = vmatprep.subr.mxu0 0.0
  %292 = vmatpush1.msra.mxu0 0.0
  %293 = vmatprep.subr.mxu0 0.0
  %294 = vmatpush1.msra.mxu0 0.0
  %295 = vmatprep.subr.mxu0 0.0
  %296 = vmatpush1.msra.mxu0 0.0
  %297 = vmatprep.subr.mxu0 0.0
  %298 = vmatpush1.msra.mxu0 0.0
  %299 = vmatprep.subr.mxu0 0.0
  %300 = vmatpush1.msra.mxu0 0.0
  %301 = vmatprep.subr.mxu0 0.0
  %302 = vmatpush1.msra.mxu0 0.0
  %303 = vmatprep.subr.mxu0 0.0
  %304 = vmatpush1.msra.mxu0 0.0
  %305 = vmatprep.subr.mxu0 0.0
  %306 = vmatpush1.msra.mxu0 0.0
  %307 = vmatprep.subr.mxu0 0.0
  %308 = vmatpush1.msra.mxu0 0.0
  %309 = vmatprep.subr.mxu0 0.0
  %310 = vmatpush1.msra.mxu0 0.0
  %311 = vmatprep.subr.mxu0 0.0
  %312 = vmatpush1.msra.mxu0 0.0
  %313 = vmatprep.subr.mxu0 0.0
  %314 = vmatpush1.msra.mxu0 0.0
  %315 = vmatprep.subr.mxu0 0.0
  %316 = vmatpush1.msra.mxu0 0.0
  %317 = vmatprep.subr.mxu0 0.0
  %318 = vmatpush1.msra.mxu0 0.0
  %319 = vmatprep.subr.mxu0 0.0
  %320 = vmatpush1.msra.mxu0 0.0
  %321 = vmatprep.subr.mxu0 0.0
  %322 = vmatpush1.msra.mxu0 0.0
  %323 = vmatprep.subr.mxu0 0.0
  %324 = vmatpush1.msra.mxu0 0.0
  %325 = vmatprep.subr.mxu0 0.0
  %326 = vmatpush1.msra.mxu0 0.0
  %327 = vmatprep.subr.mxu0 0.0
  %328 = vmatpush1.msra.mxu0 0.0
  %329 = vmatprep.subr.mxu0 0.0
  %330 = vmatpush1.msra.mxu0 0.0
  %331 = vmatprep.subr.mxu0 0.0
  %332 = vmatpush1.msra.mxu0 0.0
  %333 = vmatprep.subr.mxu0 0.0
  %334 = vmatpush1.msra.mxu0 0.0
  %335 = vmatprep.subr.mxu0 0.0
  %336 = vmatpush1.msra.mxu0 0.0
  %337 = vmatprep.subr.mxu0 0.0
  %338 = vmatpush1.msra.mxu0 0.0
  %339 = vmatprep.subr.mxu0 0.0
  %340 = vmatpush1.msra.mxu0 0.0
  %341 = vmatprep.subr.mxu0 0.0
  %342 = vmatpush1.msra.mxu0 0.0
  %343 = vmatprep.subr.mxu0 0.0
  %344 = vmatpush1.msra.mxu0 0.0
  %345 = vmatprep.subr.mxu0 0.0
  %346 = vmatpush1.msra.mxu0 0.0
  %347 = vmatprep.subr.mxu0 0.0
  %348 = vmatpush1.msra.mxu0 0.0
  %349 = vmatprep.mubr.f32.mxu0 0.0
  %350 = vmatmul.mubr.f32.gmra.mrb[0].mxu0 %v51
  %v351 = vpop.f32.mrb[0].mxu0
  %v352 = vadd.f32 0.0, %v351
  %v353 = vpop.f32.mrb[0].mxu0
  %354 = vmatprep.mubr.f32.mxu0 0.0
  %355 = vmatmul.mubr.f32.gmra.mrb[0].mxu0 %v54
  %v356 = vpop.f32.mrb[0].mxu0
  %v357 = vadd.f32 0.0, %v356
  %v358 = vpop.f32.mrb[0].mxu0
  %359 = vdwg.mxu0
  %360 = vmatprep.subr.mxu0 0.0
  %361 = vmatpush1.msra.mxu0 %v279
  %362 = vmatprep.subr.mxu0 0.0
  %363 = vmatpush1.msra.mxu0 %v280
  %364 = vmatprep.subr.mxu0 0.0
  %365 = vmatpush1.msra.mxu0 %v281
  %366 = vmatprep.subr.mxu0 0.0
  %367 = vmatpush1.msra.mxu0 %v282
  %368 = vmatprep.subr.mxu0 0.0
  %369 = vmatpush1.msra.mxu0 0.0
  %370 = vmatprep.subr.mxu0 0.0
  %371 = vmatpush1.msra.mxu0 0.0
  %372 = vmatprep.subr.mxu0 0.0
  %373 = vmatpush1.msra.mxu0 0.0
  %374 = vmatprep.subr.mxu0 0.0
  %375 = vmatpush1.msra.mxu0 0.0
  %376 = vmatprep.subr.mxu0 0.0
  %377 = vmatpush1.msra.mxu0 0.0
  %378 = vmatprep.subr.mxu0 0.0
  %379 = vmatpush1.msra.mxu0 0.0
  %380 = vmatprep.subr.mxu0 0.0
  %381 = vmatpush1.msra.mxu0 0.0
  %382 = vmatprep.subr.mxu0 0.0
  %383 = vmatpush1.msra.mxu0 0.0
  %384 = vmatprep.subr.mxu0 0.0
  %385 = vmatpush1.msra.mxu0 0.0
  %386 = vmatprep.subr.mxu0 0.0
  %387 = vmatpush1.msra.mxu0 0.0
  %388 = vmatprep.subr.mxu0 0.0
  %389 = vmatpush1.msra.mxu0 0.0
  %390 = vmatprep.subr.mxu0 0.0
  %391 = vmatpush1.msra.mxu0 0.0
  %392 = vmatprep.subr.mxu0 0.0
  %393 = vmatpush1.msra.mxu0 0.0
  %394 = vmatprep.subr.mxu0 0.0
  %395 = vmatpush1.msra.mxu0 0.0
  %396 = vmatprep.subr.mxu0 0.0
  %397 = vmatpush1.msra.mxu0 0.0
  %398 = vmatprep.subr.mxu0 0.0
  %399 = vmatpush1.msra.mxu0 0.0
  %400 = vmatprep.subr.mxu0 0.0
  %401 = vmatpush1.msra.mxu0 0.0
  %402 = vmatprep.subr.mxu0 0.0
  %403 = vmatpush1.msra.mxu0 0.0
  %404 = vmatprep.subr.mxu0 0.0
  %405 = vmatpush1.msra.mxu0 0.0
  %406 = vmatprep.subr.mxu0 0.0
  %407 = vmatpush1.msra.mxu0 0.0
  %408 = vmatprep.subr.mxu0 0.0
  %409 = vmatpush1.msra.mxu0 0.0
  %410 = vmatprep.subr.mxu0 0.0
  %411 = vmatpush1.msra.mxu0 0.0
  %412 = vmatprep.subr.mxu0 0.0
  %413 = vmatpush1.msra.mxu0 0.0
  %414 = vmatprep.subr.mxu0 0.0
  %415 = vmatpush1.msra.mxu0 0.0
  %416 = vmatprep.subr.mxu0 0.0
  %417 = vmatpush1.msra.mxu0 0.0
  %418 = vmatprep.subr.mxu0 0.0
  %419 = vmatpush1.msra.mxu0 0.0
  %420 = vmatprep.subr.mxu0 0.0
  %421 = vmatpush1.msra.mxu0 0.0
  %422 = vmatprep.subr.mxu0 0.0
  %423 = vmatpush1.msra.mxu0 0.0
  %424 = vmatprep.mubr.f32.mxu0 0.0
  %425 = vmatmul.mubr.f32.gmra.mrb[0].mxu0 %v133
  %v426 = vpop.f32.mrb[0].mxu0
  %v427 = vadd.f32 %v352, %v426
  %v428 = vpop.f32.mrb[0].mxu0
  %429 = vmatprep.mubr.f32.mxu0 0.0
  %430 = vmatmul.mubr.f32.gmra.mrb[0].mxu0 %v136
  %v431 = vpop.f32.mrb[0].mxu0
  %v432 = vadd.f32 %v357, %v431
  %v433 = vpop.f32.mrb[0].mxu0
  %434 = vdwg.mxu0
  %v435 = vld [vmem:[%s9] sm:$0x1]
  %v437 = vlaneseq
  %v438 = vshrl.u32 %v437, 7
  %v439 = vsub.s32 0, %v438
  %v440 = vrot.slane %v435, %v439
  %v442 = vadd.f32 %v427, %v440
  %v443 = vadd.f32 %v432, %v440
  %444 = vst [vmem:[%s11] sm:$0xff] %v442
  %445 = vst [vmem:[%s11 + $0x8] sm:$0xff] %v443
  // Predicated region
  $region42: #{seq_in_site_forward.2} parent=0 // pred_check
    _
  $region43: #{seq_in_site_forward.2} parent=0 // pred_check_branch
    %447 = sbr.rel (0) target = $region45
  $region44: #{seq_in_site_forward.2} parent=0 // pred_region
    _
  $region45: #{seq_in_site_forward.2} parent=0 // pred_fallthru
    _
  // Predicated region
  $region46: #{seq_in_site_forward.2} parent=0 // pred_check
    _
  $region47: #{seq_in_site_forward.2} parent=0 // pred_check_branch
    %449 = sbr.rel (0) target = $region49
  $region48: #{seq_in_site_forward.2} parent=0 // pred_region
    _
  $region49: #{seq_in_site_forward.2} parent=0 // pred_fallthru
    _
  // Predicated region
  $region50: #{seq_in_site_forward.2} parent=0 // pred_check
    _
  $region51: #{seq_in_site_forward.2} parent=0 // pred_check_branch
    %451 = sbr.rel (0) target = $region53
  $region52: #{seq_in_site_forward.2} parent=0 // pred_region
    _
  $region53: #{seq_in_site_forward.2} parent=0 // pred_fallthru
    _
  // Predicated region
  $region54: #{seq_in_site_forward.2} parent=0 // pred_check
    _
  $region55: #{seq_in_site_forward.2} parent=0 // pred_check_branch
    %453 = sbr.rel (0) target = $region57
  $region56: #{seq_in_site_forward.2} parent=0 // pred_region
    _
  $region57: #{seq_in_site_forward.2} parent=0 // pred_fallthru
    _

// kernel: seq_in_site_forward.3
$region0: #{seq_in_site_forward.3}
  #allocation0 [shape = 'u32[]', space=smem, size = 0x4, offset = 0x4, fixed_abs, tag = 'smem constant byte address 0x4 - core index']
  #allocation1 [shape = 'u32[144,128]{1,0:T(1,128)}', space=vmem, size = 0x12000, scoped, tag = 'internal scratch']
  #allocation2 [shape = 'f32[2,128]{1,0:T(2,128)}', space=vmem, size = 0x400, scoped, tag = 'scratch operand']
  #allocation3 [shape = 'f32[8,1,2]{2,1,0:T(1,128)}', space=vmem, size = 0x1000, scoped, tag = 'scratch operand']
  #allocation4 [shape = 'f32[1,1]{1,0:T(1,128)S(1)}', space=vmem, size = 0x200, scoped, tag = 'scoped memory for seq_in_site_forward.3']
  %s0 = inlined_call_operand.vmem [shape: f32[8,2,128], index: 0, kind: input, shape index: {}]
  %s1 = inlined_call_operand.vmem [shape: f32[8,1,2], index: 1, kind: input, shape index: {}]
  %s2 = inlined_call_operand.vmem [shape: f32[128,128], index: 2, kind: input, shape index: {}]
  %s3 = inlined_call_operand.vmem [shape: f32[1,128], index: 3, kind: input, shape index: {}]
  %s4 = inlined_call_operand.<no memory space> [shape: f32[1,1], index: 4, kind: input, shape index: {}]
  %s5 = inlined_call_operand.vmem [shape: f32[8,1,2], index: 5, kind: output, shape index: {}]
  %s6 = sld [smem:[#allocation0]]
  $region30: #{seq_in_site_forward.3} parent=0
    _
  %s8 = ssub.s32 1, %s6
  %s9 = scalar_select 0, %s8, %s6
  %v10 = vstv %s4
  %11 = vst [vmem:[#allocation4] sm:$0x1] %v10
  // Predicated region
  $region2: #{seq_in_site_forward.3} parent=0 // pred_check
    _
  $region3: #{seq_in_site_forward.3} parent=0 // pred_check_branch
    %13 = sbr.rel (0) target = $region5
  $region4: #{seq_in_site_forward.3} parent=0 // pred_region
    _
  $region5: #{seq_in_site_forward.3} parent=0 // pred_fallthru
    _
  // Predicated region
  $region6: #{seq_in_site_forward.3} parent=0 // pred_check
    _
  $region7: #{seq_in_site_forward.3} parent=0 // pred_check_branch
    %15 = sbr.rel (0) target = $region9
  $region8: #{seq_in_site_forward.3} parent=0 // pred_region
    _
  $region9: #{seq_in_site_forward.3} parent=0 // pred_fallthru
    _
  // Predicated region
  $region10: #{seq_in_site_forward.3} parent=0 // pred_check
    _
  $region11: #{seq_in_site_forward.3} parent=0 // pred_check_branch
    %17 = sbr.rel (0) target = $region13
  $region12: #{seq_in_site_forward.3} parent=0 // pred_region
    _
  $region13: #{seq_in_site_forward.3} parent=0 // pred_fallthru
    _
  // Predicated region
  $region14: #{seq_in_site_forward.3} parent=0 // pred_check
    _
  $region15: #{seq_in_site_forward.3} parent=0 // pred_check_branch
    %19 = sbr.rel (0) target = $region17
  $region16: #{seq_in_site_forward.3} parent=0 // pred_region
    _
  $region17: #{seq_in_site_forward.3} parent=0 // pred_fallthru
    _
  // Predicated region
  $region18: #{seq_in_site_forward.3} parent=0 // pred_check
    _
  $region19: #{seq_in_site_forward.3} parent=0 // pred_check_branch
    %21 = sbr.rel (0) target = $region21
  $region20: #{seq_in_site_forward.3} parent=0 // pred_region
    _
  $region21: #{seq_in_site_forward.3} parent=0 // pred_fallthru
    _
  %v22 = vld [vmem:[%s2] sm:$0xff]
  %v23 = vld [vmem:[%s2 + $0x8] sm:$0xff]
  %v24 = vld [vmem:[%s2 + $0x10] sm:$0xff]
  %v25 = vld [vmem:[%s2 + $0x18] sm:$0xff]
  %v26 = vld [vmem:[%s2 + $0x20] sm:$0xff]
  %v27 = vld [vmem:[%s2 + $0x28] sm:$0xff]
  %v28 = vld [vmem:[%s2 + $0x30] sm:$0xff]
  %v29 = vld [vmem:[%s2 + $0x38] sm:$0xff]
  %v30 = vld [vmem:[%s2 + $0x40] sm:$0xff]
  %v31 = vld [vmem:[%s2 + $0x48] sm:$0xff]
  %v32 = vld [vmem:[%s2 + $0x50] sm:$0xff]
  %v33 = vld [vmem:[%s2 + $0x58] sm:$0xff]
  %v34 = vld [vmem:[%s2 + $0x60] sm:$0xff]
  %v35 = vld [vmem:[%s2 + $0x68] sm:$0xff]
  %v36 = vld [vmem:[%s2 + $0x70] sm:$0xff]
  %v37 = vld [vmem:[%s2 + $0x78] sm:$0xff]
  %v38 = vld [vmem:[%s3] sm:$0x1]
  %v39 = vld [vmem:[#allocation4] sm:$0x1]
  %40 = vst [vmem:[#allocation2] sm:$0x3] 0.0
  %v41 = vld [vmem:[%s0] sm:$0x3]
  %v42 = vld [vmem:[#allocation2] sm:$0x3]
  %43 = vmatprep.subr.mxu0 0.0
  %44 = vmatpush1.msra.mxu0 %v22
  %45 = vmatprep.subr.mxu0 0.0
  %46 = vmatpush1.msra.mxu0 %v23
  %47 = vmatprep.subr.mxu0 0.0
  %48 = vmatpush1.msra.mxu0 %v24
  %49 = vmatprep.subr.mxu0 0.0
  %50 = vmatpush1.msra.mxu0 %v25
  %51 = vmatprep.subr.mxu0 0.0
  %52 = vmatpush1.msra.mxu0 %v26
  %53 = vmatprep.subr.mxu0 0.0
  %54 = vmatpush1.msra.mxu0 %v27
  %55 = vmatprep.subr.mxu0 0.0
  %56 = vmatpush1.msra.mxu0 %v28
  %57 = vmatprep.subr.mxu0 0.0
  %58 = vmatpush1.msra.mxu0 %v29
  %59 = vmatprep.subr.mxu0 0.0
  %60 = vmatpush1.msra.mxu0 %v30
  %61 = vmatprep.subr.mxu0 0.0
  %62 = vmatpush1.msra.mxu0 %v31
  %63 = vmatprep.subr.mxu0 0.0
  %64 = vmatpush1.msra.mxu0 %v32
  %65 = vmatprep.subr.mxu0 0.0
  %66 = vmatpush1.msra.mxu0 %v33
  %67 = vmatprep.subr.mxu0 0.0
  %68 = vmatpush1.msra.mxu0 %v34
  %69 = vmatprep.subr.mxu0 0.0
  %70 = vmatpush1.msra.mxu0 %v35
  %71 = vmatprep.subr.mxu0 0.0
  %72 = vmatpush1.msra.mxu0 %v36
  %73 = vmatprep.subr.mxu0 0.0
  %74 = vmatpush1.msra.mxu0 %v37
  %75 = vmatprep.subr.mxu0 0.0
  %76 = vmatpush1.msra.mxu0 0.0
  %77 = vmatprep.subr.mxu0 0.0
  %78 = vmatpush1.msra.mxu0 0.0
  %79 = vmatprep.subr.mxu0 0.0
  %80 = vmatpush1.msra.mxu0 0.0
  %81 = vmatprep.subr.mxu0 0.0
  %82 = vmatpush1.msra.mxu0 0.0
  %83 = vmatprep.subr.mxu0 0.0
  %84 = vmatpush1.msra.mxu0 0.0
  %85 = vmatprep.subr.mxu0 0.0
  %86 = vmatpush1.msra.mxu0 0.0
  %87 = vmatprep.subr.mxu0 0.0
  %88 = vmatpush1.msra.mxu0 0.0
  %89 = vmatprep.subr.mxu0 0.0
  %90 = vmatpush1.msra.mxu0 0.0
  %91 = vmatprep.subr.mxu0 0.0
  %92 = vmatpush1.msra.mxu0 0.0
  %93 = vmatprep.subr.mxu0 0.0
  %94 = vmatpush1.msra.mxu0 0.0
  %95 = vmatprep.subr.mxu0 0.0
  %96 = vmatpush1.msra.mxu0 0.0
  %97 = vmatprep.subr.mxu0 0.0
  %98 = vmatpush1.msra.mxu0 0.0
  %99 = vmatprep.subr.mxu0 0.0
  %100 = vmatpush1.msra.mxu0 0.0
  %101 = vmatprep.subr.mxu0 0.0
  %102 = vmatpush1.msra.mxu0 0.0
  %103 = vmatprep.subr.mxu0 0.0
  %104 = vmatpush1.msra.mxu0 0.0
  %105 = vmatprep.subr.mxu0 0.0
  %106 = vmatpush1.msra.mxu0 0.0
  %107 = vmatprep.mubr.f32.mxu0 0.0
  %108 = vmatmul.mubr.f32.gmra.mrb[0].mxu0 %v42
  %v109 = vpop.f32.mrb[0].mxu0
  %v110 = vadd.f32 0.0, %v109
  %v111 = vpop.f32.mrb[0].mxu0
  %112 = vdwg.mxu0
  %v113 = vadd.f32 %v41, %v110
  %v114 = vtanh.pop %v113
  %115 = vst [vmem:[#allocation2] sm:$0x3] %v114
  %v117 = vlaneseq
  %v118 = vshrl.u32 %v117, 7
  %v119 = vsub.s32 0, %v118
  %v120 = vrot.slane %v38, %v119
  %v122 = vmul.f32 %v114, %v120
  %vm123 = vcmask 1041408
  %v124 = vsel %vm123, %v122, 0.0
  %125 = vadd.xlane.f32.xlu0 %v124
  %v126 = vpop.xlane.xlu0 %125
  %128 = vset.pattern.permute.xlu0 0
  %129 = vperm.xlu0 %128, %v39
  %v130 = vpop.permute.xlu0 %129
  %v132 = vlaneseq
  %v133 = vshrl.u32 %v132, 7
  %v134 = vsub.s32 0, %v133
  %v135 = vrot.slane %v130, %v134
  %v136 = vadd.f32 %v126, %v135
  %v137 = vxor.u32 %v136, 2147483648
  %v138 = vmul.f32 %v137, 1.442695
  %v139 = vpow.pop %v138
  %v140 = vadd.f32 %v139, 1.0
  %v141 = vrcp.pop %v140
  %v142 = vmul.f32 1.0, %v141
  %v144 = vlaneseq
  %v145 = vand.u32 %v144, 127
  %v146 = vlaneseq
  %v147 = vshrl.u32 %v146, 7
  %v148 = vsub.s32 %v145, %v147
  %v149 = vrot.slane %v142, %v148
  %vm151 = vcmask 8192
  %152 = vst.msk [vmem:[#allocation3] sm:$0x1] %vm151, %v149
  %s153 = scalar_lea.vmem %s0, 2
  %v154 = vld [vmem:[%s153] sm:$0x3]
  %v155 = vld [vmem:[#allocation2] sm:$0x3]
  %156 = vmatprep.subr.mxu0 0.0
  %157 = vmatpush1.msra.mxu0 %v22
  %158 = vmatprep.subr.mxu0 0.0
  %159 = vmatpush1.msra.mxu0 %v23
  %160 = vmatprep.subr.mxu0 0.0
  %161 = vmatpush1.msra.mxu0 %v24
  %162 = vmatprep.subr.mxu0 0.0
  %163 = vmatpush1.msra.mxu0 %v25
  %164 = vmatprep.subr.mxu0 0.0
  %165 = vmatpush1.msra.mxu0 %v26
  %166 = vmatprep.subr.mxu0 0.0
  %167 = vmatpush1.msra.mxu0 %v27
  %168 = vmatprep.subr.mxu0 0.0
  %169 = vmatpush1.msra.mxu0 %v28
  %170 = vmatprep.subr.mxu0 0.0
  %171 = vmatpush1.msra.mxu0 %v29
  %172 = vmatprep.subr.mxu0 0.0
  %173 = vmatpush1.msra.mxu0 %v30
  %174 = vmatprep.subr.mxu0 0.0
  %175 = vmatpush1.msra.mxu0 %v31
  %176 = vmatprep.subr.mxu0 0.0
  %177 = vmatpush1.msra.mxu0 %v32
  %178 = vmatprep.subr.mxu0 0.0
  %179 = vmatpush1.msra.mxu0 %v33
  %180 = vmatprep.subr.mxu0 0.0
  %181 = vmatpush1.msra.mxu0 %v34
  %182 = vmatprep.subr.mxu0 0.0
  %183 = vmatpush1.msra.mxu0 %v35
  %184 = vmatprep.subr.mxu0 0.0
  %185 = vmatpush1.msra.mxu0 %v36
  %186 = vmatprep.subr.mxu0 0.0
  %187 = vmatpush1.msra.mxu0 %v37
  %188 = vmatprep.subr.mxu0 0.0
  %189 = vmatpush1.msra.mxu0 0.0
  %190 = vmatprep.subr.mxu0 0.0
  %191 = vmatpush1.msra.mxu0 0.0
  %192 = vmatprep.subr.mxu0 0.0
  %193 = vmatpush1.msra.mxu0 0.0
  %194 = vmatprep.subr.mxu0 0.0
  %195 = vmatpush1.msra.mxu0 0.0
  %196 = vmatprep.subr.mxu0 0.0
  %197 = vmatpush1.msra.mxu0 0.0
  %198 = vmatprep.subr.mxu0 0.0
  %199 = vmatpush1.msra.mxu0 0.0
  %200 = vmatprep.subr.mxu0 0.0
  %201 = vmatpush1.msra.mxu0 0.0
  %202 = vmatprep.subr.mxu0 0.0
  %203 = vmatpush1.msra.mxu0 0.0
  %204 = vmatprep.subr.mxu0 0.0
  %205 = vmatpush1.msra.mxu0 0.0
  %206 = vmatprep.subr.mxu0 0.0
  %207 = vmatpush1.msra.mxu0 0.0
  %208 = vmatprep.subr.mxu0 0.0
  %209 = vmatpush1.msra.mxu0 0.0
  %210 = vmatprep.subr.mxu0 0.0
  %211 = vmatpush1.msra.mxu0 0.0
  %212 = vmatprep.subr.mxu0 0.0
  %213 = vmatpush1.msra.mxu0 0.0
  %214 = vmatprep.subr.mxu0 0.0
  %215 = vmatpush1.msra.mxu0 0.0
  %216 = vmatprep.subr.mxu0 0.0
  %217 = vmatpush1.msra.mxu0 0.0
  %218 = vmatprep.subr.mxu0 0.0
  %219 = vmatpush1.msra.mxu0 0.0
  %220 = vmatprep.mubr.f32.mxu0 0.0
  %221 = vmatmul.mubr.f32.gmra.mrb[0].mxu0 %v155
  %v222 = vpop.f32.mrb[0].mxu0
  %v223 = vadd.f32 0.0, %v222
  %v224 = vpop.f32.mrb[0].mxu0
  %225 = vdwg.mxu0
  %v226 = vadd.f32 %v154, %v223
  %v227 = vtanh.pop %v226
  %228 = vst [vmem:[#allocation2] sm:$0x3] %v227
  %v229 = vmul.f32 %v227, %v120
  %v230 = vsel %vm123, %v229, 0.0
  %231 = vadd.xlane.f32.xlu0 %v230
  %v232 = vpop.xlane.xlu0 %231
  %v233 = vadd.f32 %v232, %v135
  %v234 = vxor.u32 %v233, 2147483648
  %v235 = vmul.f32 %v234, 1.442695
  %v236 = vpow.pop %v235
  %v237 = vadd.f32 %v236, 1.0
  %v238 = vrcp.pop %v237
  %v239 = vmul.f32 1.0, %v238
  %v241 = vlaneseq
  %v242 = vshrl.u32 %v241, 7
  %v243 = vsub.s32 %v145, %v242
  %v244 = vrot.slane %v239, %v243
  %s246 = scalar_lea.vmem [#allocation3], 1
  %247 = vst.msk [vmem:[%s246] sm:$0x1] %vm151, %v244
  %s248 = scalar_lea.vmem %s0, 4
  %v249 = vld [vmem:[%s248] sm:$0x3]
  %v250 = vld [vmem:[#allocation2] sm:$0x3]
  %251 = vmatprep.subr.mxu0 0.0
  %252 = vmatpush1.msra.mxu0 %v22
  %253 = vmatprep.subr.mxu0 0.0
  %254 = vmatpush1.msra.mxu0 %v23
  %255 = vmatprep.subr.mxu0 0.0
  %256 = vmatpush1.msra.mxu0 %v24
  %257 = vmatprep.subr.mxu0 0.0
  %258 = vmatpush1.msra.mxu0 %v25
  %259 = vmatprep.subr.mxu0 0.0
  %260 = vmatpush1.msra.mxu0 %v26
  %261 = vmatprep.subr.mxu0 0.0
  %262 = vmatpush1.msra.mxu0 %v27
  %263 = vmatprep.subr.mxu0 0.0
  %264 = vmatpush1.msra.mxu0 %v28
  %265 = vmatprep.subr.mxu0 0.0
  %266 = vmatpush1.msra.mxu0 %v29
  %267 = vmatprep.subr.mxu0 0.0
  %268 = vmatpush1.msra.mxu0 %v30
  %269 = vmatprep.subr.mxu0 0.0
  %270 = vmatpush1.msra.mxu0 %v31
  %271 = vmatprep.subr.mxu0 0.0
  %272 = vmatpush1.msra.mxu0 %v32
  %273 = vmatprep.subr.mxu0 0.0
  %274 = vmatpush1.msra.mxu0 %v33
  %275 = vmatprep.subr.mxu0 0.0
  %276 = vmatpush1.msra.mxu0 %v34
  %277 = vmatprep.subr.mxu0 0.0
  %278 = vmatpush1.msra.mxu0 %v35
  %279 = vmatprep.subr.mxu0 0.0
  %280 = vmatpush1.msra.mxu0 %v36
  %281 = vmatprep.subr.mxu0 0.0
  %282 = vmatpush1.msra.mxu0 %v37
  %283 = vmatprep.subr.mxu0 0.0
  %284 = vmatpush1.msra.mxu0 0.0
  %285 = vmatprep.subr.mxu0 0.0
  %286 = vmatpush1.msra.mxu0 0.0
  %287 = vmatprep.subr.mxu0 0.0
  %288 = vmatpush1.msra.mxu0 0.0
  %289 = vmatprep.subr.mxu0 0.0
  %290 = vmatpush1.msra.mxu0 0.0
  %291 = vmatprep.subr.mxu0 0.0
  %292 = vmatpush1.msra.mxu0 0.0
  %293 = vmatprep.subr.mxu0 0.0
  %294 = vmatpush1.msra.mxu0 0.0
  %295 = vmatprep.subr.mxu0 0.0
  %296 = vmatpush1.msra.mxu0 0.0
  %297 = vmatprep.subr.mxu0 0.0
  %298 = vmatpush1.msra.mxu0 0.0
  %299 = vmatprep.subr.mxu0 0.0
  %300 = vmatpush1.msra.mxu0 0.0
  %301 = vmatprep.subr.mxu0 0.0
  %302 = vmatpush1.msra.mxu0 0.0
  %303 = vmatprep.subr.mxu0 0.0
  %304 = vmatpush1.msra.mxu0 0.0
  %305 = vmatprep.subr.mxu0 0.0
  %306 = vmatpush1.msra.mxu0 0.0
  %307 = vmatprep.subr.mxu0 0.0
  %308 = vmatpush1.msra.mxu0 0.0
  %309 = vmatprep.subr.mxu0 0.0
  %310 = vmatpush1.msra.mxu0 0.0
  %311 = vmatprep.subr.mxu0 0.0
  %312 = vmatpush1.msra.mxu0 0.0
  %313 = vmatprep.subr.mxu0 0.0
  %314 = vmatpush1.msra.mxu0 0.0
  %315 = vmatprep.mubr.f32.mxu0 0.0
  %316 = vmatmul.mubr.f32.gmra.mrb[0].mxu0 %v250
  %v317 = vpop.f32.mrb[0].mxu0
  %v318 = vadd.f32 0.0, %v317
  %v319 = vpop.f32.mrb[0].mxu0
  %320 = vdwg.mxu0
  %v321 = vadd.f32 %v249, %v318
  %v322 = vtanh.pop %v321
  %323 = vst [vmem:[#allocation2] sm:$0x3] %v322
  %v324 = vmul.f32 %v322, %v120
  %v325 = vsel %vm123, %v324, 0.0
  %326 = vadd.xlane.f32.xlu0 %v325
  %v327 = vpop.xlane.xlu0 %326
  %v328 = vadd.f32 %v327, %v135
  %v329 = vxor.u32 %v328, 2147483648
  %v330 = vmul.f32 %v329, 1.442695
  %v331 = vpow.pop %v330
  %v332 = vadd.f32 %v331, 1.0
  %v333 = vrcp.pop %v332
  %v334 = vmul.f32 1.0, %v333
  %v336 = vlaneseq
  %v337 = vshrl.u32 %v336, 7
  %v338 = vsub.s32 %v145, %v337
  %v339 = vrot.slane %v334, %v338
  %s341 = scalar_lea.vmem [#allocation3], 2
  %342 = vst.msk [vmem:[%s341] sm:$0x1] %vm151, %v339
  %s343 = scalar_lea.vmem %s0, 6
  %v344 = vld [vmem:[%s343] sm:$0x3]
  %v345 = vld [vmem:[#allocation2] sm:$0x3]
  %346 = vmatprep.subr.mxu0 0.0
  %347 = vmatpush1.msra.mxu0 %v22
  %348 = vmatprep.subr.mxu0 0.0
  %349 = vmatpush1.msra.mxu0 %v23
  %350 = vmatprep.subr.mxu0 0.0
  %351 = vmatpush1.msra.mxu0 %v24
  %352 = vmatprep.subr.mxu0 0.0
  %353 = vmatpush1.msra.mxu0 %v25
  %354 = vmatprep.subr.mxu0 0.0
  %355 = vmatpush1.msra.mxu0 %v26
  %356 = vmatprep.subr.mxu0 0.0
  %357 = vmatpush1.msra.mxu0 %v27
  %358 = vmatprep.subr.mxu0 0.0
  %359 = vmatpush1.msra.mxu0 %v28
  %360 = vmatprep.subr.mxu0 0.0
  %361 = vmatpush1.msra.mxu0 %v29
  %362 = vmatprep.subr.mxu0 0.0
  %363 = vmatpush1.msra.mxu0 %v30
  %364 = vmatprep.subr.mxu0 0.0
  %365 = vmatpush1.msra.mxu0 %v31
  %366 = vmatprep.subr.mxu0 0.0
  %367 = vmatpush1.msra.mxu0 %v32
  %368 = vmatprep.subr.mxu0 0.0
  %369 = vmatpush1.msra.mxu0 %v33
  %370 = vmatprep.subr.mxu0 0.0
  %371 = vmatpush1.msra.mxu0 %v34
  %372 = vmatprep.subr.mxu0 0.0
  %373 = vmatpush1.msra.mxu0 %v35
  %374 = vmatprep.subr.mxu0 0.0
  %375 = vmatpush1.msra.mxu0 %v36
  %376 = vmatprep.subr.mxu0 0.0
  %377 = vmatpush1.msra.mxu0 %v37
  %378 = vmatprep.subr.mxu0 0.0
  %379 = vmatpush1.msra.mxu0 0.0
  %380 = vmatprep.subr.mxu0 0.0
  %381 = vmatpush1.msra.mxu0 0.0
  %382 = vmatprep.subr.mxu0 0.0
  %383 = vmatpush1.msra.mxu0 0.0
  %384 = vmatprep.subr.mxu0 0.0
  %385 = vmatpush1.msra.mxu0 0.0
  %386 = vmatprep.subr.mxu0 0.0
  %387 = vmatpush1.msra.mxu0 0.0
  %388 = vmatprep.subr.mxu0 0.0
  %389 = vmatpush1.msra.mxu0 0.0
  %390 = vmatprep.subr.mxu0 0.0
  %391 = vmatpush1.msra.mxu0 0.0
  %392 = vmatprep.subr.mxu0 0.0
  %393 = vmatpush1.msra.mxu0 0.0
  %394 = vmatprep.subr.mxu0 0.0
  %395 = vmatpush1.msra.mxu0 0.0
  %396 = vmatprep.subr.mxu0 0.0
  %397 = vmatpush1.msra.mxu0 0.0
  %398 = vmatprep.subr.mxu0 0.0
  %399 = vmatpush1.msra.mxu0 0.0
  %400 = vmatprep.subr.mxu0 0.0
  %401 = vmatpush1.msra.mxu0 0.0
  %402 = vmatprep.subr.mxu0 0.0
  %403 = vmatpush1.msra.mxu0 0.0
  %404 = vmatprep.subr.mxu0 0.0
  %405 = vmatpush1.msra.mxu0 0.0
  %406 = vmatprep.subr.mxu0 0.0
  %407 = vmatpush1.msra.mxu0 0.0
  %408 = vmatprep.subr.mxu0 0.0
  %409 = vmatpush1.msra.mxu0 0.0
  %410 = vmatprep.mubr.f32.mxu0 0.0
  %411 = vmatmul.mubr.f32.gmra.mrb[0].mxu0 %v345
  %v412 = vpop.f32.mrb[0].mxu0
  %v413 = vadd.f32 0.0, %v412
  %v414 = vpop.f32.mrb[0].mxu0
  %415 = vdwg.mxu0
  %v416 = vadd.f32 %v344, %v413
  %v417 = vtanh.pop %v416
  %418 = vst [vmem:[#allocation2] sm:$0x3] %v417
  %v419 = vmul.f32 %v417, %v120
  %v420 = vsel %vm123, %v419, 0.0
  %421 = vadd.xlane.f32.xlu0 %v420
  %v422 = vpop.xlane.xlu0 %421
  %v423 = vadd.f32 %v422, %v135
  %v424 = vxor.u32 %v423, 2147483648
  %v425 = vmul.f32 %v424, 1.442695
  %v426 = vpow.pop %v425
  %v427 = vadd.f32 %v426, 1.0
  %v428 = vrcp.pop %v427
  %v429 = vmul.f32 1.0, %v428
  %v431 = vlaneseq
  %v432 = vshrl.u32 %v431, 7
  %v433 = vsub.s32 %v145, %v432
  %v434 = vrot.slane %v429, %v433
  %s436 = scalar_lea.vmem [#allocation3], 3
  %437 = vst.msk [vmem:[%s436] sm:$0x1] %vm151, %v434
  %s438 = scalar_lea.vmem %s0, 8
  %v439 = vld [vmem:[%s438] sm:$0x3]
  %v440 = vld [vmem:[#allocation2] sm:$0x3]
  %441 = vmatprep.subr.mxu0 0.0
  %442 = vmatpush1.msra.mxu0 %v22
  %443 = vmatprep.subr.mxu0 0.0
  %444 = vmatpush1.msra.mxu0 %v23
  %445 = vmatprep.subr.mxu0 0.0
  %446 = vmatpush1.msra.mxu0 %v24
  %447 = vmatprep.subr.mxu0 0.0
  %448 = vmatpush1.msra.mxu0 %v25
  %449 = vmatprep.subr.mxu0 0.0
  %450 = vmatpush1.msra.mxu0 %v26
  %451 = vmatprep.subr.mxu0 0.0
  %452 = vmatpush1.msra.mxu0 %v27
  %453 = vmatprep.subr.mxu0 0.0
  %454 = vmatpush1.msra.mxu0 %v28
  %455 = vmatprep.subr.mxu0 0.0
  %456 = vmatpush1.msra.mxu0 %v29
  %457 = vmatprep.subr.mxu0 0.0
  %458 = vmatpush1.msra.mxu0 %v30
  %459 = vmatprep.subr.mxu0 0.0
  %460 = vmatpush1.msra.mxu0 %v31
  %461 = vmatprep.subr.mxu0 0.0
  %462 = vmatpush1.msra.mxu0 %v32
  %463 = vmatprep.subr.mxu0 0.0
  %464 = vmatpush1.msra.mxu0 %v33
  %465 = vmatprep.subr.mxu0 0.0
  %466 = vmatpush1.msra.mxu0 %v34
  %467 = vmatprep.subr.mxu0 0.0
  %468 = vmatpush1.msra.mxu0 %v35
  %469 = vmatprep.subr.mxu0 0.0
  %470 = vmatpush1.msra.mxu0 %v36
  %471 = vmatprep.subr.mxu0 0.0
  %472 = vmatpush1.msra.mxu0 %v37
  %473 = vmatprep.subr.mxu0 0.0
  %474 = vmatpush1.msra.mxu0 0.0
  %475 = vmatprep.subr.mxu0 0.0
  %476 = vmatpush1.msra.mxu0 0.0
  %477 = vmatprep.subr.mxu0 0.0
  %478 = vmatpush1.msra.mxu0 0.0
  %479 = vmatprep.subr.mxu0 0.0
  %480 = vmatpush1.msra.mxu0 0.0
  %481 = vmatprep.subr.mxu0 0.0
  %482 = vmatpush1.msra.mxu0 0.0
  %483 = vmatprep.subr.mxu0 0.0
  %484 = vmatpush1.msra.mxu0 0.0
  %485 = vmatprep.subr.mxu0 0.0
  %486 = vmatpush1.msra.mxu0 0.0
  %487 = vmatprep.subr.mxu0 0.0
  %488 = vmatpush1.msra.mxu0 0.0
  %489 = vmatprep.subr.mxu0 0.0
  %490 = vmatpush1.msra.mxu0 0.0
  %491 = vmatprep.subr.mxu0 0.0
  %492 = vmatpush1.msra.mxu0 0.0
  %493 = vmatprep.subr.mxu0 0.0
  %494 = vmatpush1.msra.mxu0 0.0
  %495 = vmatprep.subr.mxu0 0.0
  %496 = vmatpush1.msra.mxu0 0.0
  %497 = vmatprep.subr.mxu0 0.0
  %498 = vmatpush1.msra.mxu0 0.0
  %499 = vmatprep.subr.mxu0 0.0
  %500 = vmatpush1.msra.mxu0 0.0
  %501 = vmatprep.subr.mxu0 0.0
  %502 = vmatpush1.msra.mxu0 0.0
  %503 = vmatprep.subr.mxu0 0.0
  %504 = vmatpush1.msra.mxu0 0.0
  %505 = vmatprep.mubr.f32.mxu0 0.0
  %506 = vmatmul.mubr.f32.gmra.mrb[0].mxu0 %v440
  %v507 = vpop.f32.mrb[0].mxu0
  %v508 = vadd.f32 0.0, %v507
  %v509 = vpop.f32.mrb[0].mxu0
  %510 = vdwg.mxu0
  %v511 = vadd.f32 %v439, %v508
  %v512 = vtanh.pop %v511
  %513 = vst [vmem:[#allocation2] sm:$0x3] %v512
  %v514 = vmul.f32 %v512, %v120
  %v515 = vsel %vm123, %v514, 0.0
  %516 = vadd.xlane.f32.xlu0 %v515
  %v517 = vpop.xlane.xlu0 %516
  %v518 = vadd.f32 %v517, %v135
  %v519 = vxor.u32 %v518, 2147483648
  %v520 = vmul.f32 %v519, 1.442695
  %v521 = vpow.pop %v520
  %v522 = vadd.f32 %v521, 1.0
  %v523 = vrcp.pop %v522
  %v524 = vmul.f32 1.0, %v523
  %v526 = vlaneseq
  %v527 = vshrl.u32 %v526, 7
  %v528 = vsub.s32 %v145, %v527
  %v529 = vrot.slane %v524, %v528
  %s531 = scalar_lea.vmem [#allocation3], 4
  %532 = vst.msk [vmem:[%s531] sm:$0x1] %vm151, %v529
  %s533 = scalar_lea.vmem %s0, 10
  %v534 = vld [vmem:[%s533] sm:$0x3]
  %v535 = vld [vmem:[#allocation2] sm:$0x3]
  %536 = vmatprep.subr.mxu0 0.0
  %537 = vmatpush1.msra.mxu0 %v22
  %538 = vmatprep.subr.mxu0 0.0
  %539 = vmatpush1.msra.mxu0 %v23
  %540 = vmatprep.subr.mxu0 0.0
  %541 = vmatpush1.msra.mxu0 %v24
  %542 = vmatprep.subr.mxu0 0.0
  %543 = vmatpush1.msra.mxu0 %v25
  %544 = vmatprep.subr.mxu0 0.0
  %545 = vmatpush1.msra.mxu0 %v26
  %546 = vmatprep.subr.mxu0 0.0
  %547 = vmatpush1.msra.mxu0 %v27
  %548 = vmatprep.subr.mxu0 0.0
  %549 = vmatpush1.msra.mxu0 %v28
  %550 = vmatprep.subr.mxu0 0.0
  %551 = vmatpush1.msra.mxu0 %v29
  %552 = vmatprep.subr.mxu0 0.0
  %553 = vmatpush1.msra.mxu0 %v30
  %554 = vmatprep.subr.mxu0 0.0
  %555 = vmatpush1.msra.mxu0 %v31
  %556 = vmatprep.subr.mxu0 0.0
  %557 = vmatpush1.msra.mxu0 %v32
  %558 = vmatprep.subr.mxu0 0.0
  %559 = vmatpush1.msra.mxu0 %v33
  %560 = vmatprep.subr.mxu0 0.0
  %561 = vmatpush1.msra.mxu0 %v34
  %562 = vmatprep.subr.mxu0 0.0
  %563 = vmatpush1.msra.mxu0 %v35
  %564 = vmatprep.subr.mxu0 0.0
  %565 = vmatpush1.msra.mxu0 %v36
  %566 = vmatprep.subr.mxu0 0.0
  %567 = vmatpush1.msra.mxu0 %v37
  %568 = vmatprep.subr.mxu0 0.0
  %569 = vmatpush1.msra.mxu0 0.0
  %570 = vmatprep.subr.mxu0 0.0
  %571 = vmatpush1.msra.mxu0 0.0
  %572 = vmatprep.subr.mxu0 0.0
  %573 = vmatpush1.msra.mxu0 0.0
  %574 = vmatprep.subr.mxu0 0.0
  %575 = vmatpush1.msra.mxu0 0.0
  %576 = vmatprep.subr.mxu0 0.0
  %577 = vmatpush1.msra.mxu0 0.0
  %578 = vmatprep.subr.mxu0 0.0
  %579 = vmatpush1.msra.mxu0 0.0
  %580 = vmatprep.subr.mxu0 0.0
  %581 = vmatpush1.msra.mxu0 0.0
  %582 = vmatprep.subr.mxu0 0.0
  %583 = vmatpush1.msra.mxu0 0.0
  %584 = vmatprep.subr.mxu0 0.0
  %585 = vmatpush1.msra.mxu0 0.0
  %586 = vmatprep.subr.mxu0 0.0
  %587 = vmatpush1.msra.mxu0 0.0
  %588 = vmatprep.subr.mxu0 0.0
  %589 = vmatpush1.msra.mxu0 0.0
  %590 = vmatprep.subr.mxu0 0.0
  %591 = vmatpush1.msra.mxu0 0.0
  %592 = vmatprep.subr.mxu0 0.0
  %593 = vmatpush1.msra.mxu0 0.0
  %594 = vmatprep.subr.mxu0 0.0
  %595 = vmatpush1.msra.mxu0 0.0
  %596 = vmatprep.subr.mxu0 0.0
  %597 = vmatpush1.msra.mxu0 0.0
  %598 = vmatprep.subr.mxu0 0.0
  %599 = vmatpush1.msra.mxu0 0.0
  %600 = vmatprep.mubr.f32.mxu0 0.0
  %601 = vmatmul.mubr.f32.gmra.mrb[0].mxu0 %v535
  %v602 = vpop.f32.mrb[0].mxu0
  %v603 = vadd.f32 0.0, %v602
  %v604 = vpop.f32.mrb[0].mxu0
  %605 = vdwg.mxu0
  %v606 = vadd.f32 %v534, %v603
  %v607 = vtanh.pop %v606
  %608 = vst [vmem:[#allocation2] sm:$0x3] %v607
  %v609 = vmul.f32 %v607, %v120
  %v610 = vsel %vm123, %v609, 0.0
  %611 = vadd.xlane.f32.xlu0 %v610
  %v612 = vpop.xlane.xlu0 %611
  %v613 = vadd.f32 %v612, %v135
  %v614 = vxor.u32 %v613, 2147483648
  %v615 = vmul.f32 %v614, 1.442695
  %v616 = vpow.pop %v615
  %v617 = vadd.f32 %v616, 1.0
  %v618 = vrcp.pop %v617
  %v619 = vmul.f32 1.0, %v618
  %v621 = vlaneseq
  %v622 = vshrl.u32 %v621, 7
  %v623 = vsub.s32 %v145, %v622
  %v624 = vrot.slane %v619, %v623
  %s626 = scalar_lea.vmem [#allocation3], 5
  %627 = vst.msk [vmem:[%s626] sm:$0x1] %vm151, %v624
  %s628 = scalar_lea.vmem %s0, 12
  %v629 = vld [vmem:[%s628] sm:$0x3]
  %v630 = vld [vmem:[#allocation2] sm:$0x3]
  %631 = vmatprep.subr.mxu0 0.0
  %632 = vmatpush1.msra.mxu0 %v22
  %633 = vmatprep.subr.mxu0 0.0
  %634 = vmatpush1.msra.mxu0 %v23
  %635 = vmatprep.subr.mxu0 0.0
  %636 = vmatpush1.msra.mxu0 %v24
  %637 = vmatprep.subr.mxu0 0.0
  %638 = vmatpush1.msra.mxu0 %v25
  %639 = vmatprep.subr.mxu0 0.0
  %640 = vmatpush1.msra.mxu0 %v26
  %641 = vmatprep.subr.mxu0 0.0
  %642 = vmatpush1.msra.mxu0 %v27
  %643 = vmatprep.subr.mxu0 0.0
  %644 = vmatpush1.msra.mxu0 %v28
  %645 = vmatprep.subr.mxu0 0.0
  %646 = vmatpush1.msra.mxu0 %v29
  %647 = vmatprep.subr.mxu0 0.0
  %648 = vmatpush1.msra.mxu0 %v30
  %649 = vmatprep.subr.mxu0 0.0
  %650 = vmatpush1.msra.mxu0 %v31
  %651 = vmatprep.subr.mxu0 0.0
  %652 = vmatpush1.msra.mxu0 %v32
  %653 = vmatprep.subr.mxu0 0.0
  %654 = vmatpush1.msra.mxu0 %v33
  %655 = vmatprep.subr.mxu0 0.0
  %656 = vmatpush1.msra.mxu0 %v34
  %657 = vmatprep.subr.mxu0 0.0
  %658 = vmatpush1.msra.mxu0 %v35
  %659 = vmatprep.subr.mxu0 0.0
  %660 = vmatpush1.msra.mxu0 %v36
  %661 = vmatprep.subr.mxu0 0.0
  %662 = vmatpush1.msra.mxu0 %v37
  %663 = vmatprep.subr.mxu0 0.0
  %664 = vmatpush1.msra.mxu0 0.0
  %665 = vmatprep.subr.mxu0 0.0
  %666 = vmatpush1.msra.mxu0 0.0
  %667 = vmatprep.subr.mxu0 0.0
  %668 = vmatpush1.msra.mxu0 0.0
  %669 = vmatprep.subr.mxu0 0.0
  %670 = vmatpush1.msra.mxu0 0.0
  %671 = vmatprep.subr.mxu0 0.0
  %672 = vmatpush1.msra.mxu0 0.0
  %673 = vmatprep.subr.mxu0 0.0
  %674 = vmatpush1.msra.mxu0 0.0
  %675 = vmatprep.subr.mxu0 0.0
  %676 = vmatpush1.msra.mxu0 0.0
  %677 = vmatprep.subr.mxu0 0.0
  %678 = vmatpush1.msra.mxu0 0.0
  %679 = vmatprep.subr.mxu0 0.0
  %680 = vmatpush1.msra.mxu0 0.0
  %681 = vmatprep.subr.mxu0 0.0
  %682 = vmatpush1.msra.mxu0 0.0
  %683 = vmatprep.subr.mxu0 0.0
  %684 = vmatpush1.msra.mxu0 0.0
  %685 = vmatprep.subr.mxu0 0.0
  %686 = vmatpush1.msra.mxu0 0.0
  %687 = vmatprep.subr.mxu0 0.0
  %688 = vmatpush1.msra.mxu0 0.0
  %689 = vmatprep.subr.mxu0 0.0
  %690 = vmatpush1.msra.mxu0 0.0
  %691 = vmatprep.subr.mxu0 0.0
  %692 = vmatpush1.msra.mxu0 0.0
  %693 = vmatprep.subr.mxu0 0.0
  %694 = vmatpush1.msra.mxu0 0.0
  %695 = vmatprep.mubr.f32.mxu0 0.0
  %696 = vmatmul.mubr.f32.gmra.mrb[0].mxu0 %v630
  %v697 = vpop.f32.mrb[0].mxu0
  %v698 = vadd.f32 0.0, %v697
  %v699 = vpop.f32.mrb[0].mxu0
  %700 = vdwg.mxu0
  %v701 = vadd.f32 %v629, %v698
  %v702 = vtanh.pop %v701
  %703 = vst [vmem:[#allocation2] sm:$0x3] %v702
  %v704 = vmul.f32 %v702, %v120
  %v705 = vsel %vm123, %v704, 0.0
  %706 = vadd.xlane.f32.xlu0 %v705
  %v707 = vpop.xlane.xlu0 %706
  %v708 = vadd.f32 %v707, %v135
  %v709 = vxor.u32 %v708, 2147483648
  %v710 = vmul.f32 %v709, 1.442695
  %v711 = vpow.pop %v710
  %v712 = vadd.f32 %v711, 1.0
  %v713 = vrcp.pop %v712
  %v714 = vmul.f32 1.0, %v713
  %v716 = vlaneseq
  %v717 = vshrl.u32 %v716, 7
  %v718 = vsub.s32 %v145, %v717
  %v719 = vrot.slane %v714, %v718
  %s721 = scalar_lea.vmem [#allocation3], 6
  %722 = vst.msk [vmem:[%s721] sm:$0x1] %vm151, %v719
  %s723 = scalar_lea.vmem %s0, 14
  %v724 = vld [vmem:[%s723] sm:$0x3]
  %v725 = vld [vmem:[#allocation2] sm:$0x3]
  %726 = vmatprep.subr.mxu0 0.0
  %727 = vmatpush1.msra.mxu0 %v22
  %728 = vmatprep.subr.mxu0 0.0
  %729 = vmatpush1.msra.mxu0 %v23
  %730 = vmatprep.subr.mxu0 0.0
  %731 = vmatpush1.msra.mxu0 %v24
  %732 = vmatprep.subr.mxu0 0.0
  %733 = vmatpush1.msra.mxu0 %v25
  %734 = vmatprep.subr.mxu0 0.0
  %735 = vmatpush1.msra.mxu0 %v26
  %736 = vmatprep.subr.mxu0 0.0
  %737 = vmatpush1.msra.mxu0 %v27
  %738 = vmatprep.subr.mxu0 0.0
  %739 = vmatpush1.msra.mxu0 %v28
  %740 = vmatprep.subr.mxu0 0.0
  %741 = vmatpush1.msra.mxu0 %v29
  %742 = vmatprep.subr.mxu0 0.0
  %743 = vmatpush1.msra.mxu0 %v30
  %744 = vmatprep.subr.mxu0 0.0
  %745 = vmatpush1.msra.mxu0 %v31
  %746 = vmatprep.subr.mxu0 0.0
  %747 = vmatpush1.msra.mxu0 %v32
  %748 = vmatprep.subr.mxu0 0.0
  %749 = vmatpush1.msra.mxu0 %v33
  %750 = vmatprep.subr.mxu0 0.0
  %751 = vmatpush1.msra.mxu0 %v34
  %752 = vmatprep.subr.mxu0 0.0
  %753 = vmatpush1.msra.mxu0 %v35
  %754 = vmatprep.subr.mxu0 0.0
  %755 = vmatpush1.msra.mxu0 %v36
  %756 = vmatprep.subr.mxu0 0.0
  %757 = vmatpush1.msra.mxu0 %v37
  %758 = vmatprep.subr.mxu0 0.0
  %759 = vmatpush1.msra.mxu0 0.0
  %760 = vmatprep.subr.mxu0 0.0
  %761 = vmatpush1.msra.mxu0 0.0
  %762 = vmatprep.subr.mxu0 0.0
  %763 = vmatpush1.msra.mxu0 0.0
  %764 = vmatprep.subr.mxu0 0.0
  %765 = vmatpush1.msra.mxu0 0.0
  %766 = vmatprep.subr.mxu0 0.0
  %767 = vmatpush1.msra.mxu0 0.0
  %768 = vmatprep.subr.mxu0 0.0
  %769 = vmatpush1.msra.mxu0 0.0
  %770 = vmatprep.subr.mxu0 0.0
  %771 = vmatpush1.msra.mxu0 0.0
  %772 = vmatprep.subr.mxu0 0.0
  %773 = vmatpush1.msra.mxu0 0.0
  %774 = vmatprep.subr.mxu0 0.0
  %775 = vmatpush1.msra.mxu0 0.0
  %776 = vmatprep.subr.mxu0 0.0
  %777 = vmatpush1.msra.mxu0 0.0
  %778 = vmatprep.subr.mxu0 0.0
  %779 = vmatpush1.msra.mxu0 0.0
  %780 = vmatprep.subr.mxu0 0.0
  %781 = vmatpush1.msra.mxu0 0.0
  %782 = vmatprep.subr.mxu0 0.0
  %783 = vmatpush1.msra.mxu0 0.0
  %784 = vmatprep.subr.mxu0 0.0
  %785 = vmatpush1.msra.mxu0 0.0
  %786 = vmatprep.subr.mxu0 0.0
  %787 = vmatpush1.msra.mxu0 0.0
  %788 = vmatprep.subr.mxu0 0.0
  %789 = vmatpush1.msra.mxu0 0.0
  %790 = vmatprep.mubr.f32.mxu0 0.0
  %791 = vmatmul.mubr.f32.gmra.mrb[0].mxu0 %v725
  %v792 = vpop.f32.mrb[0].mxu0
  %v793 = vadd.f32 0.0, %v792
  %v794 = vpop.f32.mrb[0].mxu0
  %795 = vdwg.mxu0
  %v796 = vadd.f32 %v724, %v793
  %v797 = vtanh.pop %v796
  %798 = vst [vmem:[#allocation2] sm:$0x3] %v797
  %v799 = vmul.f32 %v797, %v120
  %v800 = vsel %vm123, %v799, 0.0
  %801 = vadd.xlane.f32.xlu0 %v800
  %v802 = vpop.xlane.xlu0 %801
  %v803 = vadd.f32 %v802, %v135
  %v804 = vxor.u32 %v803, 2147483648
  %v805 = vmul.f32 %v804, 1.442695
  %v806 = vpow.pop %v805
  %v807 = vadd.f32 %v806, 1.0
  %v808 = vrcp.pop %v807
  %v809 = vmul.f32 1.0, %v808
  %v811 = vlaneseq
  %v812 = vshrl.u32 %v811, 7
  %v813 = vsub.s32 %v145, %v812
  %v814 = vrot.slane %v809, %v813
  %s816 = scalar_lea.vmem [#allocation3], 7
  %817 = vst.msk [vmem:[%s816] sm:$0x1] %vm151, %v814
  %v818 = vld [vmem:[#allocation3] sm:$0x1]
  %v819 = vld [vmem:[#allocation3 + $0x1] sm:$0x1]
  %v820 = vld [vmem:[#allocation3 + $0x2] sm:$0x1]
  %v821 = vld [vmem:[#allocation3 + $0x3] sm:$0x1]
  %v822 = vld [vmem:[#allocation3 + $0x4] sm:$0x1]
  %v823 = vld [vmem:[#allocation3 + $0x5] sm:$0x1]
  %v824 = vld [vmem:[#allocation3 + $0x6] sm:$0x1]
  %v825 = vld [vmem:[#allocation3 + $0x7] sm:$0x1]
  %v826 = vld [vmem:[%s1] sm:$0x1]
  %v827 = vld [vmem:[%s1 + $0x1] sm:$0x1]
  %v828 = vld [vmem:[%s1 + $0x2] sm:$0x1]
  %v829 = vld [vmem:[%s1 + $0x3] sm:$0x1]
  %v830 = vld [vmem:[%s1 + $0x4] sm:$0x1]
  %v831 = vld [vmem:[%s1 + $0x5] sm:$0x1]
  %v832 = vld [vmem:[%s1 + $0x6] sm:$0x1]
  %v833 = vld [vmem:[%s1 + $0x7] sm:$0x1]
  %v834 = vadd.f32 %v818, %v826
  %v835 = vadd.f32 %v819, %v827
  %v836 = vadd.f32 %v820, %v828
  %v837 = vadd.f32 %v821, %v829
  %v838 = vadd.f32 %v822, %v830
  %v839 = vadd.f32 %v823, %v831
  %v840 = vadd.f32 %v824, %v832
  %v841 = vadd.f32 %v825, %v833
  %v842 = vmul.f32 %v834, 0.5
  %v843 = vmul.f32 %v835, 0.5
  %v844 = vmul.f32 %v836, 0.5
  %v845 = vmul.f32 %v837, 0.5
  %v846 = vmul.f32 %v838, 0.5
  %v847 = vmul.f32 %v839, 0.5
  %v848 = vmul.f32 %v840, 0.5
  %v849 = vmul.f32 %v841, 0.5
  %850 = vst.msk [vmem:[%s5] sm:$0x1] %vm151, %v842
  %851 = vst.msk [vmem:[%s5 + $0x1] sm:$0x1] %vm151, %v843
  %852 = vst.msk [vmem:[%s5 + $0x2] sm:$0x1] %vm151, %v844
  %853 = vst.msk [vmem:[%s5 + $0x3] sm:$0x1] %vm151, %v845
  %854 = vst.msk [vmem:[%s5 + $0x4] sm:$0x1] %vm151, %v846
  %855 = vst.msk [vmem:[%s5 + $0x5] sm:$0x1] %vm151, %v847
  %856 = vst.msk [vmem:[%s5 + $0x6] sm:$0x1] %vm151, %v848
  %857 = vst.msk [vmem:[%s5 + $0x7] sm:$0x1] %vm151, %v849
  // Predicated region
  $region22: #{seq_in_site_forward.3} parent=0 // pred_check
    _
  $region23: #{seq_in_site_forward.3} parent=0 // pred_check_branch
    %859 = sbr.rel (0) target = $region25
  $region24: #{seq_in_site_forward.3} parent=0 // pred_region
    _
  $region25: #{seq_in_site_forward.3} parent=0 // pred_fallthru
    _
  // Predicated region
  $region26: #{seq_in_site_forward.3} parent=0 // pred_check
    _
  $region27: #{seq_in_site_forward.3} parent=0 // pred_check_branch
    %861 = sbr.rel (0) target = $region29
  $region28: #{seq_in_site_forward.3} parent=0 // pred_region
    _
  $region29: #{seq_in_site_forward.3} parent=0 // pred_fallthru
    _

</llo_original>
